<compile_context>
chip_gen: v7x
topology: tpu7x:2x2x1
jax: 0.10.0
libtpu: 0.0.40
codegen_flags: <defaults>
</compile_context>

<pallas_src>
import functools
import math

import jax
import jax.numpy as jnp
from jax import lax
from jax.experimental import pallas as pl
from jax.experimental.pallas import tpu as pltpu


def mha_kernel(xq_ref, xkv_ref,
               wq_ref, bq_ref, wk_ref, bk_ref, wv_ref, bv_ref,
               wo_ref, bo_ref,
               o_ref,
               q_scr, k_scr, v_scr, ctx_scr,
               *, num_heads, head_dim, hoist_kv):
    # xq_ref:  (1, tq, E)  query-row tile of the hidden state
    # xkv_ref: (1, S,  E)  full sequence (keys/values) for this batch element
    # w*_ref:  (E, E)      packed per-head projection weights (resident)
    # b*_ref:  (1, E)      packed biases
    # o_ref:   (1, tq, E)
    # *_scr:   VMEM scratch for q / K / V / concatenated-context activations
    compute_dtype = q_scr.dtype
    scale = 1.0 / math.sqrt(head_dim)   # torch: scores / sqrt(dim_k)

    def project_kv():
        xkv = xkv_ref[0]                # (S, E)
        k_scr[...] = (jnp.dot(xkv, wk_ref[...], preferred_element_type=jnp.float32)
                      + bk_ref[...]).astype(compute_dtype)
        v_scr[...] = (jnp.dot(xkv, wv_ref[...], preferred_element_type=jnp.float32)
                      + bv_ref[...]).astype(compute_dtype)

    if hoist_kv:
        # K/V depend only on the batch index: compute them once per batch
        # element (first query tile) and let the scratch persist across qi.
        @pl.when(pl.program_id(1) == 0)
        def _():
            project_kv()
    else:
        project_kv()

    # Q projection for this query tile; fold the 1/sqrt(hd) scale into Q so
    # the (tq, S) score matrix never needs an elementwise scale.
    xq = xq_ref[0]                      # (tq, E)
    q_scr[...] = ((jnp.dot(xq, wq_ref[...], preferred_element_type=jnp.float32)
                   + bq_ref[...]) * scale).astype(compute_dtype)

    # Static unroll over heads; per-head tensors are plain 2-D slices of VMEM
    # scratch.  This module uses a small head count; for very large num_heads
    # a bounded loop would reduce vreg pressure.
    # TODO(synk): switch to lax.fori_loop + pl.ds(h*head_dim, head_dim) for
    # num_heads >= ~8 once dynamic lane-offset slicing is validated on target.
    for h in range(num_heads):
        lo = h * head_dim
        qh = q_scr[:, lo:lo + head_dim]          # (tq, hd), already scaled
        kh = k_scr[:, lo:lo + head_dim]          # (S,  hd)
        vh = v_scr[:, lo:lo + head_dim]          # (S,  hd)

        # scores = qh @ kh.T  (contract head_dim), accumulate in f32.
        s = lax.dot_general(qh, kh, (((1,), (1,)), ((), ())),
                            preferred_element_type=jnp.float32)
        # Softmax with deferred normalization: keep p unnormalized, normalize
        # the small (tq, hd) context instead of the (tq, S) probabilities.
        m = jnp.max(s, axis=-1, keepdims=True)
        p = jnp.exp(s - m)
        denom = jnp.sum(p, axis=-1, keepdims=True)          # (tq, 1)
        ctx = jnp.dot(p.astype(compute_dtype), vh,
                      preferred_element_type=jnp.float32)    # (tq, hd) f32
        ctx_scr[:, lo:lo + head_dim] = (
            ctx * pl.reciprocal(denom, approx=False)).astype(compute_dtype)

    # Output projection on the concatenated context: one lane-dense MXU
    # matmul, f32 accumulate + bias.
    out = (jnp.dot(ctx_scr[...], wo_ref[...], preferred_element_type=jnp.float32)
           + bo_ref[...])
    o_ref[0] = out.astype(o_ref.dtype)


def _tpu_vmem_capacity_bytes():
    try:
        return int(pltpu.get_tpu_info().vmem_capacity_bytes)
    except Exception:
        return None


def multi_head_attention(x, wq, bq, wk, bk, wv, bv, wo, bo, *,
                         num_heads, tq=None, hoist_kv=True,
                         single_buffer_weights=True):
    """x: (B, S, E); w*: (E, E) packed per-head (in, out); b*: (E,).

    hoist_kv=True computes K/V once per batch element (qi axis "arbitrary").
    Set hoist_kv=False (qi axis "parallel") only if B == 1 on a 2-TC chip and
    megacore sharding of the query tiles outweighs the K/V recompute.
    """
    B, S, E = x.shape
    assert E % num_heads == 0
    head_dim = E // num_heads
    itemsize = jnp.dtype(x.dtype).itemsize

    vmem_phys = _tpu_vmem_capacity_bytes()
    small_vmem = vmem_phys is not None and vmem_phys <= 96 * 1024 * 1024

    if tq is None:
        # Largest MXU-friendly query tile that divides S, capped so the
        # per-head (tq, S) f32 score temporary stays small on 64 MiB chips.
        max_tq = 512 if (vmem_phys is not None and not small_vmem) else 256
        tq = S
        for cand in (512, 256, 128, 64, 32, 16, 8):
            if cand <= max_tq and S % cand == 0:
                tq = cand
                break
    assert S % tq == 0, "sequence length must be divisible by the query tile"

    # VMEM limit: leave headroom below physical VMEM for Mosaic scratch.
    if vmem_phys is None:
        vmem_limit = 64 * 1024 * 1024
    elif small_vmem:                       # v7x-class (64 MiB)
        vmem_limit = min(52 * 1024 * 1024, int(vmem_phys * 0.85))
    else:                                  # v5e/v6e-class (128 MiB)
        vmem_limit = min(104 * 1024 * 1024, int(vmem_phys * 0.85))

    bq2 = bq.reshape(1, E)
    bk2 = bk.reshape(1, E)
    bv2 = bv.reshape(1, E)
    bo2 = bo.reshape(1, E)

    kernel = functools.partial(mha_kernel, num_heads=num_heads,
                               head_dim=head_dim, hoist_kv=hoist_kv)

    # Advisory scheduling hint (matches the hoisted implementation: each
    # projection is computed once per batch element, x is read twice).
    flops = (2 * B * S * E * E * 4                          # q/k/v/o projections
             + 2 * B * num_heads * S * S * head_dim * 2)    # scores + attn @ V
    transcendentals = B * num_heads * S * S                 # softmax exp
    bytes_accessed = (3 * B * S * E + 4 * E * E + 4 * E) * itemsize
    cost = pl.CostEstimate(flops=flops, transcendentals=transcendentals,
                           bytes_accessed=bytes_accessed)

    dim_sem = ("parallel", "arbitrary") if hoist_kv else ("parallel", "parallel")

    def _call(use_buffered):
        def spec(shape, index_map, want_single_buffer):
            if use_buffered and want_single_buffer:
                # Constant / batch-only index => multibuffering buys nothing;
                # halve the VMEM these blocks occupy.
                return pl.BlockSpec(shape, index_map, pipeline_mode=pl.Buffered(1))
            return pl.BlockSpec(shape, index_map)

        w_spec = spec((E, E), lambda b, qi: (0, 0), single_buffer_weights)
        b_spec = spec((1, E), lambda b, qi: (0, 0), single_buffer_weights)
        # Keys/values input: single-buffer on small-VMEM chips (one exposed
        # DMA per batch boundary), double-buffer where VMEM is plentiful.
        xkv_spec = spec((1, S, E), lambda b, qi: (b, 0, 0), small_vmem)

        grid_spec = pltpu.PrefetchScalarGridSpec(
            num_scalar_prefetch=0,
            grid=(B, S // tq),
            in_specs=[
                pl.BlockSpec((1, tq, E), lambda b, qi: (b, qi, 0)),  # x (queries)
                xkv_spec,                                            # x (keys/values)
                w_spec, b_spec,                                      # wq, bq
                w_spec, b_spec,                                      # wk, bk
                w_spec, b_spec,                                      # wv, bv
                w_spec, b_spec,                                      # wo, bo
            ],
            out_specs=pl.BlockSpec((1, tq, E), lambda b, qi: (b, qi, 0)),
            scratch_shapes=[
                pltpu.VMEM((tq, E), x.dtype),   # q (scaled)
                pltpu.VMEM((S, E), x.dtype),    # K (persists across qi)
                pltpu.VMEM((S, E), x.dtype),    # V (persists across qi)
                pltpu.VMEM((tq, E), x.dtype),   # concatenated context
            ],
        )
        return pl.pallas_call(
            kernel,
            out_shape=jax.ShapeDtypeStruct((B, S, E), x.dtype),
            grid_spec=grid_spec,
            compiler_params=pltpu.CompilerParams(
                dimension_semantics=dim_sem,
                vmem_limit_bytes=vmem_limit),
            cost_estimate=cost,
        )(x, x, wq, bq2, wk, bk2, wv, bv2, wo, bo2)

    try:
        return _call(True)
    except (TypeError, NotImplementedError, ValueError, pltpu.LoweringException):
        # pipeline_mode / Buffered(1) unsupported in this JAX build: fall back
        # to default (double-buffered) resident blocks.  Genuine kernel errors
        # re-raise from the fallback path.
        return _call(False)


def multi_head_attention_ref(x, wq, bq, wk, bk, wv, bv, wo, bo, num_heads):
    """Pure-JAX reference matching the PyTorch module (packed-weight layout)."""
    B, S, E = x.shape
    hd = E // num_heads
    hp = "highest"
    q = jnp.einsum("bse,ef->bsf", x, wq, precision=hp) + bq
    k = jnp.einsum("bse,ef->bsf", x, wk, precision=hp) + bk
    v = jnp.einsum("bse,ef->bsf", x, wv, precision=hp) + bv
    q = q.reshape(B, S, num_heads, hd)
    k = k.reshape(B, S, num_heads, hd)
    v = v.reshape(B, S, num_heads, hd)
    s = jnp.einsum("bqhd,bkhd->bhqk", q, k, precision=hp) / math.sqrt(hd)
    w = jax.nn.softmax(s, axis=-1)
    ctx = jnp.einsum("bhqk,bkhd->bqhd", w, v, precision=hp).reshape(B, S, E)
    return jnp.einsum("bse,ef->bsf", ctx, wo, precision=hp) + bo


if __name__ == "__main__":
    # Small config consistent with the module: embed_dim=32, num_heads=4
    # (head_dim=8), batch=2, seq=8.
    B, S, E, NH = 2, 8, 32, 4

    key = jax.random.PRNGKey(0)
    keys = jax.random.split(key, 9)
    bound = 1.0 / math.sqrt(E)   # nn.Linear-style uniform(-1/sqrt(in), 1/sqrt(in))

    def lin(k, shape):
        return jax.random.uniform(k, shape, minval=-bound, maxval=bound,
                                  dtype=jnp.float32)

    x = jax.random.normal(keys[0], (B, S, E), dtype=jnp.float32)
    wq, bq = lin(keys[1], (E, E)), lin(keys[2], (E,))
    wk, bk = lin(keys[3], (E, E)), lin(keys[4], (E,))
    wv, bv = lin(keys[5], (E, E)), lin(keys[6], (E,))
    wo, bo = lin(keys[7], (E, E)), lin(keys[8], (E,))

    # f32 path (tight parity with the PyTorch-equivalent reference).
    out = multi_head_attention(x, wq, bq, wk, bk, wv, bv, wo, bo, num_heads=NH)
    out = jax.block_until_ready(out)
    ref = multi_head_attention_ref(x, wq, bq, wk, bk, wv, bv, wo, bo, NH)
    assert out.shape == (B, S, E)
    assert jnp.allclose(out, ref, atol=1e-4, rtol=1e-4), "f32 mismatch vs reference"

    # bf16 fast path (v6e/v7x recommendation): bf16 weights/activations,
    # f32 accumulation + f32 softmax inside the kernel.
    bf = jnp.bfloat16
    out_bf = multi_head_attention(
        x.astype(bf), wq.astype(bf), bq.astype(bf), wk.astype(bf), bk.astype(bf),
        wv.astype(bf), bv.astype(bf), wo.astype(bf), bo.astype(bf), num_heads=NH)
    out_bf = jax.block_until_ready(out_bf)
    assert out_bf.dtype == bf
    assert jnp.allclose(out_bf.astype(jnp.float32), ref, atol=5e-2, rtol=5e-2), \
        "bf16 mismatch vs reference"

    print("KERNEL_OK")
</pallas_src>

<mosaic_0001>
module attributes {stable_mosaic.version = 11 : i64} {
  func.func @mha_kernel(%arg0: i32, %arg1: i32, %arg2: memref<1x8x32xf32, #tpu.memory_space<vmem>>, %arg3: memref<1x8x32xf32, #tpu.memory_space<vmem>>, %arg4: memref<32x32xf32, #tpu.memory_space<vmem>>, %arg5: memref<1x32xf32, #tpu.memory_space<vmem>>, %arg6: memref<32x32xf32, #tpu.memory_space<vmem>>, %arg7: memref<1x32xf32, #tpu.memory_space<vmem>>, %arg8: memref<32x32xf32, #tpu.memory_space<vmem>>, %arg9: memref<1x32xf32, #tpu.memory_space<vmem>>, %arg10: memref<32x32xf32, #tpu.memory_space<vmem>>, %arg11: memref<1x32xf32, #tpu.memory_space<vmem>>, %arg12: memref<1x8x32xf32, #tpu.memory_space<vmem>>, %arg13: memref<8x32xf32, #tpu.memory_space<vmem>>, %arg14: memref<8x32xf32, #tpu.memory_space<vmem>>, %arg15: memref<8x32xf32, #tpu.memory_space<vmem>>, %arg16: memref<8x32xf32, #tpu.memory_space<vmem>>) attributes {dimension_semantics = [#tpu.dimension_semantics<parallel>, #tpu.dimension_semantics<arbitrary>], iteration_bounds = array<i64: 2, 1>, scalar_prefetch = 0 : i64, scratch_operands = 4 : i64, tpu.core_type = #tpu.core_type<tc>, window_params = [{transform_indices = @transform_0, window_bounds = array<i64: 1, 8, 32>}, {transform_indices = @transform_1, window_bounds = array<i64: 1, 8, 32>}, {pipeline_mode = #tpu.pipeline_mode<synchronous>, transform_indices = @transform_2, window_bounds = array<i64: 32, 32>}, {pipeline_mode = #tpu.pipeline_mode<synchronous>, transform_indices = @transform_3, window_bounds = array<i64: 1, 32>}, {pipeline_mode = #tpu.pipeline_mode<synchronous>, transform_indices = @transform_4, window_bounds = array<i64: 32, 32>}, {pipeline_mode = #tpu.pipeline_mode<synchronous>, transform_indices = @transform_5, window_bounds = array<i64: 1, 32>}, {pipeline_mode = #tpu.pipeline_mode<synchronous>, transform_indices = @transform_6, window_bounds = array<i64: 32, 32>}, {pipeline_mode = #tpu.pipeline_mode<synchronous>, transform_indices = @transform_7, window_bounds = array<i64: 1, 32>}, {pipeline_mode = #tpu.pipeline_mode<synchronous>, transform_indices = @transform_8, window_bounds = array<i64: 32, 32>}, {pipeline_mode = #tpu.pipeline_mode<synchronous>, transform_indices = @transform_9, window_bounds = array<i64: 1, 32>}, {transform_indices = @transform_10, window_bounds = array<i64: 1, 8, 32>}]} {
    %c0_i32 = arith.constant 0 : i32
    %0 = arith.cmpi eq, %arg1, %c0_i32 : i32
    %1 = arith.extui %0 : i1 to i32
    %c0_i32_0 = arith.constant 0 : i32
    %2 = arith.cmpi ne, %1, %c0_i32_0 : i32
    scf.if %2 {
      %c0_65 = arith.constant 0 : index
      %c0_66 = arith.constant 0 : index
      %c0_67 = arith.constant 0 : index
      %86 = vector.load %arg3[%c0_65, %c0_66, %c0_67] : memref<1x8x32xf32, #tpu.memory_space<vmem>>, vector<1x8x32xf32>
      %87 = vector.shape_cast %86 : vector<1x8x32xf32> to vector<8x32xf32>
      %c0_68 = arith.constant 0 : index
      %c0_69 = arith.constant 0 : index
      %88 = vector.load %arg6[%c0_68, %c0_69] : memref<32x32xf32, #tpu.memory_space<vmem>>, vector<32x32xf32>
      %cst_70 = arith.constant dense<0.000000e+00> : vector<8x32xf32>
      %89 = tpu.matmul %87, %88, %cst_70 {dimension_numbers = #tpu.dot_dimension_numbers<[1], [0], [0], [1], [0, 0, 1, 1], [], []>} : vector<8x32xf32>, vector<32x32xf32>, vector<8x32xf32> -> vector<8x32xf32>
      %c0_71 = arith.constant 0 : index
      %c0_72 = arith.constant 0 : index
      %90 = vector.load %arg7[%c0_71, %c0_72] : memref<1x32xf32, #tpu.memory_space<vmem>>, vector<1x32xf32>
      %91 = vector.broadcast %90 : vector<1x32xf32> to vector<8x32xf32>
      %92 = arith.addf %89, %91 : vector<8x32xf32>
      %c0_73 = arith.constant 0 : index
      %c0_74 = arith.constant 0 : index
      %93 = vector.load %arg14[%c0_73, %c0_74] : memref<8x32xf32, #tpu.memory_space<vmem>>, vector<8x32xf32>
      tpu.vector_store %arg14[%c0_73, %c0_74], %92 {strides = array<i32>} : memref<8x32xf32, #tpu.memory_space<vmem>>, vector<8x32xf32>,
      %c0_75 = arith.constant 0 : index
      %c0_76 = arith.constant 0 : index
      %94 = vector.load %arg8[%c0_75, %c0_76] : memref<32x32xf32, #tpu.memory_space<vmem>>, vector<32x32xf32>
      %cst_77 = arith.constant dense<0.000000e+00> : vector<8x32xf32>
      %95 = tpu.matmul %87, %94, %cst_77 {dimension_numbers = #tpu.dot_dimension_numbers<[1], [0], [0], [1], [0, 0, 1, 1], [], []>} : vector<8x32xf32>, vector<32x32xf32>, vector<8x32xf32> -> vector<8x32xf32>
      %c0_78 = arith.constant 0 : index
      %c0_79 = arith.constant 0 : index
      %96 = vector.load %arg9[%c0_78, %c0_79] : memref<1x32xf32, #tpu.memory_space<vmem>>, vector<1x32xf32>
      %97 = vector.broadcast %96 : vector<1x32xf32> to vector<8x32xf32>
      %98 = arith.addf %95, %97 : vector<8x32xf32>
      %c0_80 = arith.constant 0 : index
      %c0_81 = arith.constant 0 : index
      %99 = vector.load %arg15[%c0_80, %c0_81] : memref<8x32xf32, #tpu.memory_space<vmem>>, vector<8x32xf32>
      tpu.vector_store %arg15[%c0_80, %c0_81], %98 {strides = array<i32>} : memref<8x32xf32, #tpu.memory_space<vmem>>, vector<8x32xf32>,
    } else {
    }
    %c0 = arith.constant 0 : index
    %c0_1 = arith.constant 0 : index
    %c0_2 = arith.constant 0 : index
    %3 = vector.load %arg2[%c0, %c0_1, %c0_2] : memref<1x8x32xf32, #tpu.memory_space<vmem>>, vector<1x8x32xf32>
    %4 = vector.shape_cast %3 : vector<1x8x32xf32> to vector<8x32xf32>
    %c0_3 = arith.constant 0 : index
    %c0_4 = arith.constant 0 : index
    %5 = vector.load %arg4[%c0_3, %c0_4] : memref<32x32xf32, #tpu.memory_space<vmem>>, vector<32x32xf32>
    %cst = arith.constant dense<0.000000e+00> : vector<8x32xf32>
    %6 = tpu.matmul %4, %5, %cst {dimension_numbers = #tpu.dot_dimension_numbers<[1], [0], [0], [1], [0, 0, 1, 1], [], []>} : vector<8x32xf32>, vector<32x32xf32>, vector<8x32xf32> -> vector<8x32xf32>
    %c0_5 = arith.constant 0 : index
    %c0_6 = arith.constant 0 : index
    %7 = vector.load %arg5[%c0_5, %c0_6] : memref<1x32xf32, #tpu.memory_space<vmem>>, vector<1x32xf32>
    %8 = vector.broadcast %7 : vector<1x32xf32> to vector<8x32xf32>
    %9 = arith.addf %6, %8 : vector<8x32xf32>
    %cst_7 = arith.constant 0.353553385 : f32
    %10 = vector.broadcast %cst_7 : f32 to vector<8x32xf32>
    %11 = arith.mulf %9, %10 : vector<8x32xf32>
    %c0_8 = arith.constant 0 : index
    %c0_9 = arith.constant 0 : index
    %12 = vector.load %arg13[%c0_8, %c0_9] : memref<8x32xf32, #tpu.memory_space<vmem>>, vector<8x32xf32>
    tpu.vector_store %arg13[%c0_8, %c0_9], %11 {strides = array<i32>} : memref<8x32xf32, #tpu.memory_space<vmem>>, vector<8x32xf32>,
    %c0_10 = arith.constant 0 : index
    %c0_11 = arith.constant 0 : index
    %13 = vector.load %arg13[%c0_10, %c0_11] : memref<8x32xf32, #tpu.memory_space<vmem>>, vector<8x8xf32>
    %c0_12 = arith.constant 0 : index
    %c0_13 = arith.constant 0 : index
    %14 = vector.load %arg14[%c0_12, %c0_13] : memref<8x32xf32, #tpu.memory_space<vmem>>, vector<8x8xf32>
    %c0_14 = arith.constant 0 : index
    %c0_15 = arith.constant 0 : index
    %15 = vector.load %arg15[%c0_14, %c0_15] : memref<8x32xf32, #tpu.memory_space<vmem>>, vector<8x8xf32>
    %cst_16 = arith.constant dense<0.000000e+00> : vector<8x8xf32>
    %16 = tpu.matmul %13, %14, %cst_16 {dimension_numbers = #tpu.dot_dimension_numbers<[1], [1], [0], [0], [0, 0, 1, 0], [], []>} : vector<8x8xf32>, vector<8x8xf32>, vector<8x8xf32> -> vector<8x8xf32>
    %cst_17 = arith.constant dense<0xFF800000> : vector<8xf32>
    %17 = vector.multi_reduction <maximumf>, %16, %cst_17 [1] : vector<8x8xf32> to vector<8xf32>
    %18 = vector.shape_cast %17 : vector<8xf32> to vector<8x1xf32>
    %19 = vector.broadcast %18 : vector<8x1xf32> to vector<8x8xf32>
    %20 = arith.subf %16, %19 : vector<8x8xf32>
    %21 = math.exp %20 : vector<8x8xf32>
    %cst_18 = arith.constant dense<0.000000e+00> : vector<8xf32>
    %22 = vector.multi_reduction <add>, %21, %cst_18 [1] : vector<8x8xf32> to vector<8xf32>
    %23 = vector.shape_cast %22 : vector<8xf32> to vector<8x1xf32>
    %cst_19 = arith.constant dense<0.000000e+00> : vector<8x8xf32>
    %24 = tpu.matmul %21, %15, %cst_19 {dimension_numbers = #tpu.dot_dimension_numbers<[1], [0], [0], [1], [0, 0, 1, 1], [], []>} : vector<8x8xf32>, vector<8x8xf32>, vector<8x8xf32> -> vector<8x8xf32>
    %25 = tpu.reciprocal %23 : vector<8x1xf32> -> vector<8x1xf32>
    %26 = vector.broadcast %25 : vector<8x1xf32> to vector<8x8xf32>
    %27 = arith.mulf %24, %26 : vector<8x8xf32>
    %c0_20 = arith.constant 0 : index
    %c0_21 = arith.constant 0 : index
    %28 = vector.load %arg16[%c0_20, %c0_21] : memref<8x32xf32, #tpu.memory_space<vmem>>, vector<8x8xf32>
    tpu.vector_store %arg16[%c0_20, %c0_21], %27 {strides = array<i32>} : memref<8x32xf32, #tpu.memory_space<vmem>>, vector<8x8xf32>,
    %c0_22 = arith.constant 0 : index
    %c8 = arith.constant 8 : index
    %29 = vector.load %arg13[%c0_22, %c8] : memref<8x32xf32, #tpu.memory_space<vmem>>, vector<8x8xf32>
    %c0_23 = arith.constant 0 : index
    %c8_24 = arith.constant 8 : index
    %30 = vector.load %arg14[%c0_23, %c8_24] : memref<8x32xf32, #tpu.memory_space<vmem>>, vector<8x8xf32>
    %c0_25 = arith.constant 0 : index
    %c8_26 = arith.constant 8 : index
    %31 = vector.load %arg15[%c0_25, %c8_26] : memref<8x32xf32, #tpu.memory_space<vmem>>, vector<8x8xf32>
    %cst_27 = arith.constant dense<0.000000e+00> : vector<8x8xf32>
    %32 = tpu.matmul %29, %30, %cst_27 {dimension_numbers = #tpu.dot_dimension_numbers<[1], [1], [0], [0], [0, 0, 1, 0], [], []>} : vector<8x8xf32>, vector<8x8xf32>, vector<8x8xf32> -> vector<8x8xf32>
    %cst_28 = arith.constant dense<0xFF800000> : vector<8xf32>
    %33 = vector.multi_reduction <maximumf>, %32, %cst_28 [1] : vector<8x8xf32> to vector<8xf32>
    %34 = vector.shape_cast %33 : vector<8xf32> to vector<8x1xf32>
    %35 = vector.broadcast %34 : vector<8x1xf32> to vector<8x8xf32>
    %36 = arith.subf %32, %35 : vector<8x8xf32>
    %37 = math.exp %36 : vector<8x8xf32>
    %cst_29 = arith.constant dense<0.000000e+00> : vector<8xf32>
    %38 = vector.multi_reduction <add>, %37, %cst_29 [1] : vector<8x8xf32> to vector<8xf32>
    %39 = vector.shape_cast %38 : vector<8xf32> to vector<8x1xf32>
    %cst_30 = arith.constant dense<0.000000e+00> : vector<8x8xf32>
    %40 = tpu.matmul %37, %31, %cst_30 {dimension_numbers = #tpu.dot_dimension_numbers<[1], [0], [0], [1], [0, 0, 1, 1], [], []>} : vector<8x8xf32>, vector<8x8xf32>, vector<8x8xf32> -> vector<8x8xf32>
    %41 = tpu.reciprocal %39 : vector<8x1xf32> -> vector<8x1xf32>
    %42 = vector.broadcast %41 : vector<8x1xf32> to vector<8x8xf32>
    %43 = arith.mulf %40, %42 : vector<8x8xf32>
    %c0_31 = arith.constant 0 : index
    %c8_32 = arith.constant 8 : index
    %44 = vector.load %arg16[%c0_31, %c8_32] : memref<8x32xf32, #tpu.memory_space<vmem>>, vector<8x8xf32>
    tpu.vector_store %arg16[%c0_31, %c8_32], %43 {strides = array<i32>} : memref<8x32xf32, #tpu.memory_space<vmem>>, vector<8x8xf32>,
    %c0_33 = arith.constant 0 : index
    %c16 = arith.constant 16 : index
    %45 = vector.load %arg13[%c0_33, %c16] : memref<8x32xf32, #tpu.memory_space<vmem>>, vector<8x8xf32>
    %c0_34 = arith.constant 0 : index
    %c16_35 = arith.constant 16 : index
    %46 = vector.load %arg14[%c0_34, %c16_35] : memref<8x32xf32, #tpu.memory_space<vmem>>, vector<8x8xf32>
    %c0_36 = arith.constant 0 : index
    %c16_37 = arith.constant 16 : index
    %47 = vector.load %arg15[%c0_36, %c16_37] : memref<8x32xf32, #tpu.memory_space<vmem>>, vector<8x8xf32>
    %cst_38 = arith.constant dense<0.000000e+00> : vector<8x8xf32>
    %48 = tpu.matmul %45, %46, %cst_38 {dimension_numbers = #tpu.dot_dimension_numbers<[1], [1], [0], [0], [0, 0, 1, 0], [], []>} : vector<8x8xf32>, vector<8x8xf32>, vector<8x8xf32> -> vector<8x8xf32>
    %cst_39 = arith.constant dense<0xFF800000> : vector<8xf32>
    %49 = vector.multi_reduction <maximumf>, %48, %cst_39 [1] : vector<8x8xf32> to vector<8xf32>
    %50 = vector.shape_cast %49 : vector<8xf32> to vector<8x1xf32>
    %51 = vector.broadcast %50 : vector<8x1xf32> to vector<8x8xf32>
    %52 = arith.subf %48, %51 : vector<8x8xf32>
    %53 = math.exp %52 : vector<8x8xf32>
    %cst_40 = arith.constant dense<0.000000e+00> : vector<8xf32>
    %54 = vector.multi_reduction <add>, %53, %cst_40 [1] : vector<8x8xf32> to vector<8xf32>
    %55 = vector.shape_cast %54 : vector<8xf32> to vector<8x1xf32>
    %cst_41 = arith.constant dense<0.000000e+00> : vector<8x8xf32>
    %56 = tpu.matmul %53, %47, %cst_41 {dimension_numbers = #tpu.dot_dimension_numbers<[1], [0], [0], [1], [0, 0, 1, 1], [], []>} : vector<8x8xf32>, vector<8x8xf32>, vector<8x8xf32> -> vector<8x8xf32>
    %57 = tpu.reciprocal %55 : vector<8x1xf32> -> vector<8x1xf32>
    %58 = vector.broadcast %57 : vector<8x1xf32> to vector<8x8xf32>
    %59 = arith.mulf %56, %58 : vector<8x8xf32>
    %c0_42 = arith.constant 0 : index
    %c16_43 = arith.constant 16 : index
    %60 = vector.load %arg16[%c0_42, %c16_43] : memref<8x32xf32, #tpu.memory_space<vmem>>, vector<8x8xf32>
    tpu.vector_store %arg16[%c0_42, %c16_43], %59 {strides = array<i32>} : memref<8x32xf32, #tpu.memory_space<vmem>>, vector<8x8xf32>,
    %c0_44 = arith.constant 0 : index
    %c24 = arith.constant 24 : index
    %61 = vector.load %arg13[%c0_44, %c24] : memref<8x32xf32, #tpu.memory_space<vmem>>, vector<8x8xf32>
    %c0_45 = arith.constant 0 : index
    %c24_46 = arith.constant 24 : index
    %62 = vector.load %arg14[%c0_45, %c24_46] : memref<8x32xf32, #tpu.memory_space<vmem>>, vector<8x8xf32>
    %c0_47 = arith.constant 0 : index
    %c24_48 = arith.constant 24 : index
    %63 = vector.load %arg15[%c0_47, %c24_48] : memref<8x32xf32, #tpu.memory_space<vmem>>, vector<8x8xf32>
    %cst_49 = arith.constant dense<0.000000e+00> : vector<8x8xf32>
    %64 = tpu.matmul %61, %62, %cst_49 {dimension_numbers = #tpu.dot_dimension_numbers<[1], [1], [0], [0], [0, 0, 1, 0], [], []>} : vector<8x8xf32>, vector<8x8xf32>, vector<8x8xf32> -> vector<8x8xf32>
    %cst_50 = arith.constant dense<0xFF800000> : vector<8xf32>
    %65 = vector.multi_reduction <maximumf>, %64, %cst_50 [1] : vector<8x8xf32> to vector<8xf32>
    %66 = vector.shape_cast %65 : vector<8xf32> to vector<8x1xf32>
    %67 = vector.broadcast %66 : vector<8x1xf32> to vector<8x8xf32>
    %68 = arith.subf %64, %67 : vector<8x8xf32>
    %69 = math.exp %68 : vector<8x8xf32>
    %cst_51 = arith.constant dense<0.000000e+00> : vector<8xf32>
    %70 = vector.multi_reduction <add>, %69, %cst_51 [1] : vector<8x8xf32> to vector<8xf32>
    %71 = vector.shape_cast %70 : vector<8xf32> to vector<8x1xf32>
    %cst_52 = arith.constant dense<0.000000e+00> : vector<8x8xf32>
    %72 = tpu.matmul %69, %63, %cst_52 {dimension_numbers = #tpu.dot_dimension_numbers<[1], [0], [0], [1], [0, 0, 1, 1], [], []>} : vector<8x8xf32>, vector<8x8xf32>, vector<8x8xf32> -> vector<8x8xf32>
    %73 = tpu.reciprocal %71 : vector<8x1xf32> -> vector<8x1xf32>
    %74 = vector.broadcast %73 : vector<8x1xf32> to vector<8x8xf32>
    %75 = arith.mulf %72, %74 : vector<8x8xf32>
    %c0_53 = arith.constant 0 : index
    %c24_54 = arith.constant 24 : index
    %76 = vector.load %arg16[%c0_53, %c24_54] : memref<8x32xf32, #tpu.memory_space<vmem>>, vector<8x8xf32>
    tpu.vector_store %arg16[%c0_53, %c24_54], %75 {strides = array<i32>} : memref<8x32xf32, #tpu.memory_space<vmem>>, vector<8x8xf32>,
    %c0_55 = arith.constant 0 : index
    %c0_56 = arith.constant 0 : index
    %77 = vector.load %arg16[%c0_55, %c0_56] : memref<8x32xf32, #tpu.memory_space<vmem>>, vector<8x32xf32>
    %c0_57 = arith.constant 0 : index
    %c0_58 = arith.constant 0 : index
    %78 = vector.load %arg10[%c0_57, %c0_58] : memref<32x32xf32, #tpu.memory_space<vmem>>, vector<32x32xf32>
    %cst_59 = arith.constant dense<0.000000e+00> : vector<8x32xf32>
    %79 = tpu.matmul %77, %78, %cst_59 {dimension_numbers = #tpu.dot_dimension_numbers<[1], [0], [0], [1], [0, 0, 1, 1], [], []>} : vector<8x32xf32>, vector<32x32xf32>, vector<8x32xf32> -> vector<8x32xf32>
    %c0_60 = arith.constant 0 : index
    %c0_61 = arith.constant 0 : index
    %80 = vector.load %arg11[%c0_60, %c0_61] : memref<1x32xf32, #tpu.memory_space<vmem>>, vector<1x32xf32>
    %81 = vector.broadcast %80 : vector<1x32xf32> to vector<8x32xf32>
    %82 = arith.addf %79, %81 : vector<8x32xf32>
    %c0_62 = arith.constant 0 : index
    %c0_63 = arith.constant 0 : index
    %c0_64 = arith.constant 0 : index
    %83 = vector.load %arg12[%c0_62, %c0_63, %c0_64] : memref<1x8x32xf32, #tpu.memory_space<vmem>>, vector<1x8x32xf32>
    %84 = vector.shape_cast %83 : vector<1x8x32xf32> to vector<8x32xf32>
    %85 = vector.shape_cast %82 : vector<8x32xf32> to vector<1x8x32xf32>
    tpu.vector_store %arg12[%c0_62, %c0_63, %c0_64], %85 {strides = array<i32>} : memref<1x8x32xf32, #tpu.memory_space<vmem>>, vector<1x8x32xf32>,
    return
  }
  func.func @transform_0(%arg0: i32, %arg1: i32) -> (i32, i32, i32) {
    %c0_i32 = arith.constant 0 : i32
    %c0_i32_0 = arith.constant 0 : i32
    return %arg0, %arg1, %c0_i32 : i32, i32, i32
  }
  func.func @transform_1(%arg0: i32, %arg1: i32) -> (i32, i32, i32) {
    %c0_i32 = arith.constant 0 : i32
    %c0_i32_0 = arith.constant 0 : i32
    %c0_i32_1 = arith.constant 0 : i32
    return %arg0, %c0_i32, %c0_i32_0 : i32, i32, i32
  }
  func.func @transform_2(%arg0: i32, %arg1: i32) -> (i32, i32) {
    %c0_i32 = arith.constant 0 : i32
    %c0_i32_0 = arith.constant 0 : i32
    %c0_i32_1 = arith.constant 0 : i32
    return %c0_i32, %c0_i32_0 : i32, i32
  }
  func.func @transform_3(%arg0: i32, %arg1: i32) -> (i32, i32) {
    %c0_i32 = arith.constant 0 : i32
    %c0_i32_0 = arith.constant 0 : i32
    %c0_i32_1 = arith.constant 0 : i32
    return %c0_i32, %c0_i32_0 : i32, i32
  }
  func.func @transform_4(%arg0: i32, %arg1: i32) -> (i32, i32) {
    %c0_i32 = arith.constant 0 : i32
    %c0_i32_0 = arith.constant 0 : i32
    %c0_i32_1 = arith.constant 0 : i32
    return %c0_i32, %c0_i32_0 : i32, i32
  }
  func.func @transform_5(%arg0: i32, %arg1: i32) -> (i32, i32) {
    %c0_i32 = arith.constant 0 : i32
    %c0_i32_0 = arith.constant 0 : i32
    %c0_i32_1 = arith.constant 0 : i32
    return %c0_i32, %c0_i32_0 : i32, i32
  }
  func.func @transform_6(%arg0: i32, %arg1: i32) -> (i32, i32) {
    %c0_i32 = arith.constant 0 : i32
    %c0_i32_0 = arith.constant 0 : i32
    %c0_i32_1 = arith.constant 0 : i32
    return %c0_i32, %c0_i32_0 : i32, i32
  }
  func.func @transform_7(%arg0: i32, %arg1: i32) -> (i32, i32) {
    %c0_i32 = arith.constant 0 : i32
    %c0_i32_0 = arith.constant 0 : i32
    %c0_i32_1 = arith.constant 0 : i32
    return %c0_i32, %c0_i32_0 : i32, i32
  }
  func.func @transform_8(%arg0: i32, %arg1: i32) -> (i32, i32) {
    %c0_i32 = arith.constant 0 : i32
    %c0_i32_0 = arith.constant 0 : i32
    %c0_i32_1 = arith.constant 0 : i32
    return %c0_i32, %c0_i32_0 : i32, i32
  }
  func.func @transform_9(%arg0: i32, %arg1: i32) -> (i32, i32) {
    %c0_i32 = arith.constant 0 : i32
    %c0_i32_0 = arith.constant 0 : i32
    %c0_i32_1 = arith.constant 0 : i32
    return %c0_i32, %c0_i32_0 : i32, i32
  }
  func.func @transform_10(%arg0: i32, %arg1: i32) -> (i32, i32, i32) {
    %c0_i32 = arith.constant 0 : i32
    %c0_i32_0 = arith.constant 0 : i32
    return %arg0, %arg1, %c0_i32 : i32, i32, i32
  }
}

</mosaic_0001>

<llo_original>
// kernel: tpu_custom_call.1
$region0: #{tpu_custom_call.1}
  #allocation0 [shape = 'u32[]', space=smem, size = 0x4, offset = 0x4, fixed_abs, tag = 'smem constant byte address 0x4 - core index']
  #allocation1 [shape = 'u32[144,128]{1,0:T(1,128)}', space=vmem, size = 0x12000, scoped, tag = 'internal scratch']
  #allocation2 [shape = 'f32[8,32]{1,0:T(8,128)}', space=vmem, size = 0x1000, scoped, tag = 'scratch operand']
  #allocation3 [shape = 'f32[8,32]{1,0:T(8,128)}', space=vmem, size = 0x1000, scoped, tag = 'scratch operand']
  #allocation4 [shape = 'f32[8,32]{1,0:T(8,128)}', space=vmem, size = 0x1000, scoped, tag = 'scratch operand']
  #allocation5 [shape = 'f32[8,32]{1,0:T(8,128)}', space=vmem, size = 0x1000, scoped, tag = 'scratch operand']
  %s0 = inlined_call_operand.hbm [shape: f32[2,8,32], index: 0, kind: input, shape index: {}]
  %s1 = inlined_call_operand.hbm [shape: f32[2,8,32], index: 1, kind: input, shape index: {}]
  %s2 = inlined_call_operand.hbm [shape: f32[32,32], index: 2, kind: input, shape index: {}]
  %s3 = inlined_call_operand.hbm [shape: f32[1,32], index: 3, kind: input, shape index: {}]
  %s4 = inlined_call_operand.hbm [shape: f32[32,32], index: 4, kind: input, shape index: {}]
  %s5 = inlined_call_operand.hbm [shape: f32[1,32], index: 5, kind: input, shape index: {}]
  %s6 = inlined_call_operand.hbm [shape: f32[32,32], index: 6, kind: input, shape index: {}]
  %s7 = inlined_call_operand.hbm [shape: f32[1,32], index: 7, kind: input, shape index: {}]
  %s8 = inlined_call_operand.hbm [shape: f32[32,32], index: 8, kind: input, shape index: {}]
  %s9 = inlined_call_operand.hbm [shape: f32[1,32], index: 9, kind: input, shape index: {}]
  %s10 = inlined_call_operand.hbm [shape: f32[2,8,32], index: 10, kind: output, shape index: {}]
  %s11 = sld [smem:[#allocation0]]
  $region117: #{tpu_custom_call.1} parent=0
    _
  %s13 = ssub.s32 1, %s11
  %s14 = scalar_select 0, %s13, %s11
  $region1: #{tpu_custom_call.1} parent=0
    #allocation6 [shape = 'u8[8192]{0}', space=vmem, size = 0x2000, scoped, tag = 'input window, operand 0']
    #allocation7 [shape = 's32[2]{0}', space=sflag, size = 0x8, scoped, tag = 'scoped memory for tpu_custom_call.1']
    #allocation8 [shape = 's32[2]{0}', space=sflag, size = 0x8, scoped, tag = 'scoped memory for tpu_custom_call.1']
    #allocation9 [shape = 'u8[8192]{0}', space=vmem, size = 0x2000, scoped, tag = 'input window, operand 1']
    #allocation10 [shape = 's32[2]{0}', space=sflag, size = 0x8, scoped, tag = 'scoped memory for tpu_custom_call.1']
    #allocation11 [shape = 'u8[16384]{0}', space=vmem, size = 0x4000, scoped, tag = 'input window, operand 2, single buffered']
    #allocation12 [shape = 'u8[512]{0}', space=vmem, size = 0x400, scoped, tag = 'input window, operand 3, single buffered']
    #allocation13 [shape = 's32[1]{0}', space=sflag, size = 0x4, scoped, tag = 'scoped memory for tpu_custom_call.1']
    #allocation14 [shape = 'u8[16384]{0}', space=vmem, size = 0x4000, scoped, tag = 'input window, operand 4, single buffered']
    #allocation15 [shape = 'u8[512]{0}', space=vmem, size = 0x400, scoped, tag = 'input window, operand 5, single buffered']
    #allocation16 [shape = 's32[1]{0}', space=sflag, size = 0x4, scoped, tag = 'scoped memory for tpu_custom_call.1']
    #allocation17 [shape = 'u8[16384]{0}', space=vmem, size = 0x4000, scoped, tag = 'input window, operand 6, single buffered']
    #allocation18 [shape = 'u8[512]{0}', space=vmem, size = 0x400, scoped, tag = 'input window, operand 7, single buffered']
    #allocation19 [shape = 's32[1]{0}', space=sflag, size = 0x4, scoped, tag = 'scoped memory for tpu_custom_call.1']
    #allocation20 [shape = 'u8[16384]{0}', space=vmem, size = 0x4000, scoped, tag = 'input window, operand 8, single buffered']
    #allocation21 [shape = 'u8[512]{0}', space=vmem, size = 0x400, scoped, tag = 'input window, operand 9, single buffered']
    #allocation22 [shape = 's32[1]{0}', space=sflag, size = 0x4, scoped, tag = 'scoped memory for tpu_custom_call.1']
    #allocation23 [shape = 'u8[8192]{0}', space=vmem, size = 0x2000, scoped, tag = 'output window, operand 0']
    %15 = vsyncpa [#allocation7], 0
    %s16 = scalar_lea.sflag [#allocation7], 1
    %17 = vsyncpa %s16, 0
    %18 = vsyncpa [#allocation10], 0
    %s19 = scalar_lea.sflag [#allocation10], 1
    %20 = vsyncpa %s19, 0
    %21 = vsyncpa [#allocation13], 0
    %22 = vsyncpa [#allocation16], 0
    %23 = vsyncpa [#allocation19], 0
    %24 = vsyncpa [#allocation22], 0
    %25 = vsyncpa [#allocation8], 0
    %s26 = scalar_lea.sflag [#allocation8], 1
    %27 = vsyncpa %s26, 0
    loop: start=0, step=1, limit=4
    $region2: #{tpu_custom_call.1} parent=1 // loop_pre_header
      _
    $region3: #{tpu_custom_call.1} parent=1 // loop_header
      %s29 = sphi 0, %s33
      %p30 = scmp.ge.s32.totalorder %s29, 4
      %s36 = sphi 0, %s48
      %s37 = sphi 0, %s44
      %s38 = sphi 0, %s36
      %s39 = sphi 0, %s37
      %s40 = sphi 0, %s38
      %s41 = sphi 0, %s39
      %s53 = sphi 0, %s55
      %s56 = sphi 0, %s53
      %s57 = sphi 0, %s56
      %s73 = sphi 0, %s57
      %s79 = sphi 0, %s81
      %s82 = sphi 0, %s79
      %s83 = sphi 0, %s82
      %s99 = sphi 0, %s83
      %s103 = sphi 0, %s103
      %s105 = sphi 0, %s103
      %s106 = sphi 0, %s105
      %s120 = sphi 0, %s106
      %s124 = sphi 0, %s124
      %s126 = sphi 0, %s124
      %s127 = sphi 0, %s126
      %s141 = sphi 0, %s127
      %s145 = sphi 0, %s145
      %s147 = sphi 0, %s145
      %s148 = sphi 0, %s147
      %s162 = sphi 0, %s148
      %s166 = sphi 0, %s166
      %s168 = sphi 0, %s166
      %s169 = sphi 0, %s168
      %s183 = sphi 0, %s169
      %s187 = sphi 0, %s187
      %s189 = sphi 0, %s187
      %s190 = sphi 0, %s189
      %s204 = sphi 0, %s190
      %s208 = sphi 0, %s208
      %s210 = sphi 0, %s208
      %s211 = sphi 0, %s210
      %s225 = sphi 0, %s211
      %s229 = sphi 0, %s229
      %s231 = sphi 0, %s229
      %s232 = sphi 0, %s231
      %s246 = sphi 0, %s232
      %s250 = sphi 0, %s250
      %s252 = sphi 0, %s250
      %s253 = sphi 0, %s252
      %s267 = sphi 0, %s253
      %s275 = sphi 0, %s277
      %s278 = sphi 0, %s275
      %s279 = sphi 0, %s278
      %s295 = sphi 0, %s279
    $region4: #{tpu_custom_call.1} parent=1 // loop_header_branch
      %32 = sbr.rel (%p30) target = $region8
    $region5: #{tpu_custom_call.1} parent=1 // loop_body
      %s34 = ssub.s32 %s29, 1
      %s35 = ssub.s32 %s29, 2
      %s42 = sadd.s32 1, %s37
      %p43 = scmp.ge.s32.totalorder %s42, 1
      %s44 = scalar_select %p43, 0, %s42
      %s45 = sadd.s32 1, %s36
      %s46 = scalar_select %p43, %s45, %s36
      %p47 = scmp.ge.s32.totalorder %s46, 2
      %s48 = scalar_select %p47, 0, %s46
      %s49 = ssub.s32 %s36, %s48
      %s50 = ssub.s32 %s37, %s44
      %s51 = sor.u32 %s49, %s50
      %p52 = scmp.eq.s32.totalorder %s51, 0
      %s54 = sadd.s32 %s53, 1
      %s55 = scalar_select %p52, %s53, %s54
      %p58 = pneg %p52
      %p59 = scmp.eq.s32.totalorder %s29, 1
      %p60 = por %p58, %p59
      %p61 = scmp.ne.s32.totalorder %s53, %s56
      %p62 = scmp.eq.s32.totalorder %s29, 0
      %p63 = por %p61, %p62
      %p64 = scmp.ne.s32.totalorder %s53, %s56
      %p65 = scmp.eq.s32.totalorder %s34, 1
      %p66 = por %p64, %p65
      %p67 = scmp.ne.s32.totalorder %s56, %s57
      %p68 = scmp.eq.s32.totalorder %s34, 0
      %p69 = por %p67, %p68
      %p70 = scmp.ne.s32.totalorder %s56, %s57
      %p71 = scmp.eq.s32.totalorder %s35, 1
      %p72 = por %p70, %p71
      %p74 = scmp.ne.s32.totalorder %s57, %s73
      %p75 = scmp.eq.s32.totalorder %s35, 0
      %p76 = por %p74, %p75
      %s77 = ssub.s32 %s36, %s48
      %p78 = scmp.eq.s32.totalorder %s77, 0
      %s80 = sadd.s32 %s79, 1
      %s81 = scalar_select %p78, %s79, %s80
      %p84 = pneg %p78
      %p85 = scmp.eq.s32.totalorder %s29, 1
      %p86 = por %p84, %p85
      %p87 = scmp.ne.s32.totalorder %s79, %s82
      %p88 = scmp.eq.s32.totalorder %s29, 0
      %p89 = por %p87, %p88
      %p90 = scmp.ne.s32.totalorder %s79, %s82
      %p91 = scmp.eq.s32.totalorder %s34, 1
      %p92 = por %p90, %p91
      %p93 = scmp.ne.s32.totalorder %s82, %s83
      %p94 = scmp.eq.s32.totalorder %s34, 0
      %p95 = por %p93, %p94
      %p96 = scmp.ne.s32.totalorder %s82, %s83
      %p97 = scmp.eq.s32.totalorder %s35, 1
      %p98 = por %p96, %p97
      %p100 = scmp.ne.s32.totalorder %s83, %s99
      %p101 = scmp.eq.s32.totalorder %s35, 0
      %p102 = por %p100, %p101
      %s104 = sadd.s32 %s103, 1
      %p107 = scmp.eq.s32.totalorder %s29, 1
      %p108 = scmp.ne.s32.totalorder %s103, %s105
      %p109 = scmp.eq.s32.totalorder %s29, 0
      %p110 = por %p108, %p109
      %p111 = scmp.ne.s32.totalorder %s103, %s105
      %p112 = scmp.eq.s32.totalorder %s34, 1
      %p113 = por %p111, %p112
      %p114 = scmp.ne.s32.totalorder %s105, %s106
      %p115 = scmp.eq.s32.totalorder %s34, 0
      %p116 = por %p114, %p115
      %p117 = scmp.ne.s32.totalorder %s105, %s106
      %p118 = scmp.eq.s32.totalorder %s35, 1
      %p119 = por %p117, %p118
      %p121 = scmp.ne.s32.totalorder %s106, %s120
      %p122 = scmp.eq.s32.totalorder %s35, 0
      %p123 = por %p121, %p122
      %s125 = sadd.s32 %s124, 1
      %p128 = scmp.eq.s32.totalorder %s29, 1
      %p129 = scmp.ne.s32.totalorder %s124, %s126
      %p130 = scmp.eq.s32.totalorder %s29, 0
      %p131 = por %p129, %p130
      %p132 = scmp.ne.s32.totalorder %s124, %s126
      %p133 = scmp.eq.s32.totalorder %s34, 1
      %p134 = por %p132, %p133
      %p135 = scmp.ne.s32.totalorder %s126, %s127
      %p136 = scmp.eq.s32.totalorder %s34, 0
      %p137 = por %p135, %p136
      %p138 = scmp.ne.s32.totalorder %s126, %s127
      %p139 = scmp.eq.s32.totalorder %s35, 1
      %p140 = por %p138, %p139
      %p142 = scmp.ne.s32.totalorder %s127, %s141
      %p143 = scmp.eq.s32.totalorder %s35, 0
      %p144 = por %p142, %p143
      %s146 = sadd.s32 %s145, 1
      %p149 = scmp.eq.s32.totalorder %s29, 1
      %p150 = scmp.ne.s32.totalorder %s145, %s147
      %p151 = scmp.eq.s32.totalorder %s29, 0
      %p152 = por %p150, %p151
      %p153 = scmp.ne.s32.totalorder %s145, %s147
      %p154 = scmp.eq.s32.totalorder %s34, 1
      %p155 = por %p153, %p154
      %p156 = scmp.ne.s32.totalorder %s147, %s148
      %p157 = scmp.eq.s32.totalorder %s34, 0
      %p158 = por %p156, %p157
      %p159 = scmp.ne.s32.totalorder %s147, %s148
      %p160 = scmp.eq.s32.totalorder %s35, 1
      %p161 = por %p159, %p160
      %p163 = scmp.ne.s32.totalorder %s148, %s162
      %p164 = scmp.eq.s32.totalorder %s35, 0
      %p165 = por %p163, %p164
      %s167 = sadd.s32 %s166, 1
      %p170 = scmp.eq.s32.totalorder %s29, 1
      %p171 = scmp.ne.s32.totalorder %s166, %s168
      %p172 = scmp.eq.s32.totalorder %s29, 0
      %p173 = por %p171, %p172
      %p174 = scmp.ne.s32.totalorder %s166, %s168
      %p175 = scmp.eq.s32.totalorder %s34, 1
      %p176 = por %p174, %p175
      %p177 = scmp.ne.s32.totalorder %s168, %s169
      %p178 = scmp.eq.s32.totalorder %s34, 0
      %p179 = por %p177, %p178
      %p180 = scmp.ne.s32.totalorder %s168, %s169
      %p181 = scmp.eq.s32.totalorder %s35, 1
      %p182 = por %p180, %p181
      %p184 = scmp.ne.s32.totalorder %s169, %s183
      %p185 = scmp.eq.s32.totalorder %s35, 0
      %p186 = por %p184, %p185
      %s188 = sadd.s32 %s187, 1
      %p191 = scmp.eq.s32.totalorder %s29, 1
      %p192 = scmp.ne.s32.totalorder %s187, %s189
      %p193 = scmp.eq.s32.totalorder %s29, 0
      %p194 = por %p192, %p193
      %p195 = scmp.ne.s32.totalorder %s187, %s189
      %p196 = scmp.eq.s32.totalorder %s34, 1
      %p197 = por %p195, %p196
      %p198 = scmp.ne.s32.totalorder %s189, %s190
      %p199 = scmp.eq.s32.totalorder %s34, 0
      %p200 = por %p198, %p199
      %p201 = scmp.ne.s32.totalorder %s189, %s190
      %p202 = scmp.eq.s32.totalorder %s35, 1
      %p203 = por %p201, %p202
      %p205 = scmp.ne.s32.totalorder %s190, %s204
      %p206 = scmp.eq.s32.totalorder %s35, 0
      %p207 = por %p205, %p206
      %s209 = sadd.s32 %s208, 1
      %p212 = scmp.eq.s32.totalorder %s29, 1
      %p213 = scmp.ne.s32.totalorder %s208, %s210
      %p214 = scmp.eq.s32.totalorder %s29, 0
      %p215 = por %p213, %p214
      %p216 = scmp.ne.s32.totalorder %s208, %s210
      %p217 = scmp.eq.s32.totalorder %s34, 1
      %p218 = por %p216, %p217
      %p219 = scmp.ne.s32.totalorder %s210, %s211
      %p220 = scmp.eq.s32.totalorder %s34, 0
      %p221 = por %p219, %p220
      %p222 = scmp.ne.s32.totalorder %s210, %s211
      %p223 = scmp.eq.s32.totalorder %s35, 1
      %p224 = por %p222, %p223
      %p226 = scmp.ne.s32.totalorder %s211, %s225
      %p227 = scmp.eq.s32.totalorder %s35, 0
      %p228 = por %p226, %p227
      %s230 = sadd.s32 %s229, 1
      %p233 = scmp.eq.s32.totalorder %s29, 1
      %p234 = scmp.ne.s32.totalorder %s229, %s231
      %p235 = scmp.eq.s32.totalorder %s29, 0
      %p236 = por %p234, %p235
      %p237 = scmp.ne.s32.totalorder %s229, %s231
      %p238 = scmp.eq.s32.totalorder %s34, 1
      %p239 = por %p237, %p238
      %p240 = scmp.ne.s32.totalorder %s231, %s232
      %p241 = scmp.eq.s32.totalorder %s34, 0
      %p242 = por %p240, %p241
      %p243 = scmp.ne.s32.totalorder %s231, %s232
      %p244 = scmp.eq.s32.totalorder %s35, 1
      %p245 = por %p243, %p244
      %p247 = scmp.ne.s32.totalorder %s232, %s246
      %p248 = scmp.eq.s32.totalorder %s35, 0
      %p249 = por %p247, %p248
      %s251 = sadd.s32 %s250, 1
      %p254 = scmp.eq.s32.totalorder %s29, 1
      %p255 = scmp.ne.s32.totalorder %s250, %s252
      %p256 = scmp.eq.s32.totalorder %s29, 0
      %p257 = por %p255, %p256
      %p258 = scmp.ne.s32.totalorder %s250, %s252
      %p259 = scmp.eq.s32.totalorder %s34, 1
      %p260 = por %p258, %p259
      %p261 = scmp.ne.s32.totalorder %s252, %s253
      %p262 = scmp.eq.s32.totalorder %s34, 0
      %p263 = por %p261, %p262
      %p264 = scmp.ne.s32.totalorder %s252, %s253
      %p265 = scmp.eq.s32.totalorder %s35, 1
      %p266 = por %p264, %p265
      %p268 = scmp.ne.s32.totalorder %s253, %s267
      %p269 = scmp.eq.s32.totalorder %s35, 0
      %p270 = por %p268, %p269
      %s271 = ssub.s32 %s36, %s48
      %s272 = ssub.s32 %s37, %s44
      %s273 = sor.u32 %s271, %s272
      %p274 = scmp.eq.s32.totalorder %s273, 0
      %s276 = sadd.s32 %s275, 1
      %s277 = scalar_select %p274, %s275, %s276
      %p280 = pneg %p274
      %p281 = scmp.eq.s32.totalorder %s29, 1
      %p282 = por %p280, %p281
      %p283 = scmp.ne.s32.totalorder %s275, %s278
      %p284 = scmp.eq.s32.totalorder %s29, 0
      %p285 = por %p283, %p284
      %p286 = scmp.ne.s32.totalorder %s275, %s278
      %p287 = scmp.eq.s32.totalorder %s34, 1
      %p288 = por %p286, %p287
      %p289 = scmp.ne.s32.totalorder %s278, %s279
      %p290 = scmp.eq.s32.totalorder %s34, 0
      %p291 = por %p289, %p290
      %p292 = scmp.ne.s32.totalorder %s278, %s279
      %p293 = scmp.eq.s32.totalorder %s35, 1
      %p294 = por %p292, %p293
      %p296 = scmp.ne.s32.totalorder %s279, %s295
      %p297 = scmp.eq.s32.totalorder %s35, 0
      %p298 = por %p296, %p297
      %p299 = scmp.le.s32.totalorder 1, %s29
      %p300 = scmp.lt.s32.totalorder %s29, 3
      %p301 = pnand %p299, %p300
      %p302 = pneg %p301
      // Predicated region
      $region9: #{tpu_custom_call.1} parent=5 // pred_check
        _
      $region10: #{tpu_custom_call.1} parent=5 // pred_check_branch
        %304 = sbr.rel (%p301) target = $region12
      $region11: #{tpu_custom_call.1} parent=5 // pred_region
        %s305 = ssub.s32 %s29, 1
        // Predicated region
        $region13: #{tpu_custom_call.1} parent=11 // pred_check
          %p306 = pneg %p116
        $region14: #{tpu_custom_call.1} parent=11 // pred_check_branch
          %308 = sbr.rel (%p306) target = $region16
        $region15: #{tpu_custom_call.1} parent=11 // pred_region
          %s310 = ssub.s32 512, 512
          %311 = vsyncadd [#allocation10], %s310
          %s312 = sshll.u32 [#allocation11], 4
          %s313 = int_to_ptr.vmem [resolvable:$true] %s312
          %318 = dma.hbm_to_vmem [thread:$0]  %s2, 512, %s313, [#allocation10], 128, 128, 8
        $region16: #{tpu_custom_call.1} parent=11 // pred_fallthru
          _
        // Predicated region
        $region17: #{tpu_custom_call.1} parent=11 // pred_check
          %p319 = pneg %p137
        $region18: #{tpu_custom_call.1} parent=11 // pred_check_branch
          %321 = sbr.rel (%p319) target = $region20
        $region19: #{tpu_custom_call.1} parent=11 // pred_region
          %s323 = ssub.s32 16, 16
          %324 = vsyncadd [#allocation13], %s323
          %s326 = sshll.u32 [#allocation12], 4
          %s327 = int_to_ptr.vmem [resolvable:$true] %s326
          %329 = dma.hbm_to_vmem [thread:$0]  %s3, 16, %s327, [#allocation13]
        $region20: #{tpu_custom_call.1} parent=11 // pred_fallthru
          _
        // Predicated region
        $region21: #{tpu_custom_call.1} parent=11 // pred_check
          %p330 = pneg %p158
        $region22: #{tpu_custom_call.1} parent=11 // pred_check_branch
          %332 = sbr.rel (%p330) target = $region24
        $region23: #{tpu_custom_call.1} parent=11 // pred_region
          %s334 = ssub.s32 512, 512
          %335 = vsyncadd [#allocation13], %s334
          %s336 = sshll.u32 [#allocation14], 4
          %s337 = int_to_ptr.vmem [resolvable:$true] %s336
          %342 = dma.hbm_to_vmem [thread:$0]  %s4, 512, %s337, [#allocation13], 128, 128, 8
        $region24: #{tpu_custom_call.1} parent=11 // pred_fallthru
          _
        // Predicated region
        $region25: #{tpu_custom_call.1} parent=11 // pred_check
          %p343 = pneg %p179
        $region26: #{tpu_custom_call.1} parent=11 // pred_check_branch
          %345 = sbr.rel (%p343) target = $region28
        $region27: #{tpu_custom_call.1} parent=11 // pred_region
          %s347 = ssub.s32 16, 16
          %348 = vsyncadd [#allocation16], %s347
          %s350 = sshll.u32 [#allocation15], 4
          %s351 = int_to_ptr.vmem [resolvable:$true] %s350
          %353 = dma.hbm_to_vmem [thread:$0]  %s5, 16, %s351, [#allocation16]
        $region28: #{tpu_custom_call.1} parent=11 // pred_fallthru
          _
        // Predicated region
        $region29: #{tpu_custom_call.1} parent=11 // pred_check
          %p354 = pneg %p200
        $region30: #{tpu_custom_call.1} parent=11 // pred_check_branch
          %356 = sbr.rel (%p354) target = $region32
        $region31: #{tpu_custom_call.1} parent=11 // pred_region
          %s358 = ssub.s32 512, 512
          %359 = vsyncadd [#allocation16], %s358
          %s360 = sshll.u32 [#allocation17], 4
          %s361 = int_to_ptr.vmem [resolvable:$true] %s360
          %366 = dma.hbm_to_vmem [thread:$0]  %s6, 512, %s361, [#allocation16], 128, 128, 8
        $region32: #{tpu_custom_call.1} parent=11 // pred_fallthru
          _
        // Predicated region
        $region33: #{tpu_custom_call.1} parent=11 // pred_check
          %p367 = pneg %p221
        $region34: #{tpu_custom_call.1} parent=11 // pred_check_branch
          %369 = sbr.rel (%p367) target = $region36
        $region35: #{tpu_custom_call.1} parent=11 // pred_region
          %s371 = ssub.s32 16, 16
          %372 = vsyncadd [#allocation19], %s371
          %s374 = sshll.u32 [#allocation18], 4
          %s375 = int_to_ptr.vmem [resolvable:$true] %s374
          %377 = dma.hbm_to_vmem [thread:$0]  %s7, 16, %s375, [#allocation19]
        $region36: #{tpu_custom_call.1} parent=11 // pred_fallthru
          _
        // Predicated region
        $region37: #{tpu_custom_call.1} parent=11 // pred_check
          %p378 = pneg %p242
        $region38: #{tpu_custom_call.1} parent=11 // pred_check_branch
          %380 = sbr.rel (%p378) target = $region40
        $region39: #{tpu_custom_call.1} parent=11 // pred_region
          %s382 = ssub.s32 512, 512
          %383 = vsyncadd [#allocation19], %s382
          %s384 = sshll.u32 [#allocation20], 4
          %s385 = int_to_ptr.vmem [resolvable:$true] %s384
          %390 = dma.hbm_to_vmem [thread:$0]  %s8, 512, %s385, [#allocation19], 128, 128, 8
        $region40: #{tpu_custom_call.1} parent=11 // pred_fallthru
          _
        // Predicated region
        $region41: #{tpu_custom_call.1} parent=11 // pred_check
          %p391 = pneg %p263
        $region42: #{tpu_custom_call.1} parent=11 // pred_check_branch
          %393 = sbr.rel (%p391) target = $region44
        $region43: #{tpu_custom_call.1} parent=11 // pred_region
          %s395 = ssub.s32 16, 16
          %396 = vsyncadd [#allocation22], %s395
          %s398 = sshll.u32 [#allocation21], 4
          %s399 = int_to_ptr.vmem [resolvable:$true] %s398
          %401 = dma.hbm_to_vmem [thread:$0]  %s9, 16, %s399, [#allocation22]
        $region44: #{tpu_custom_call.1} parent=11 // pred_fallthru
          _
      $region12: #{tpu_custom_call.1} parent=5 // pred_fallthru
        _
      %p402 = scmp.lt.s32.totalorder %s29, 2
      // Predicated region
      $region45: #{tpu_custom_call.1} parent=5 // pred_check
        %p403 = pneg %p402
      $region46: #{tpu_custom_call.1} parent=5 // pred_check_branch
        %405 = sbr.rel (%p403) target = $region48
      $region47: #{tpu_custom_call.1} parent=5 // pred_region
        // Predicated region
        $region49: #{tpu_custom_call.1} parent=47 // pred_check
          %p406 = pneg %p63
        $region50: #{tpu_custom_call.1} parent=47 // pred_check_branch
          %408 = sbr.rel (%p406) target = $region52
        $region51: #{tpu_custom_call.1} parent=47 // pred_region
          %s409 = sand.u32 %s53, 1
          %s410 = scalar_lea.sflag [#allocation7], %s409
          %s411 = sand.u32 %s53, 1
          %s412 = smul.addr %s411, 8
          %s413 = scalar_lea.vmem [#allocation6], %s412
          %s415 = ssub.s32 128, 128
          %416 = vsyncadd %s410, %s415
          %s417 = sadd.s32 %s37, %s36
          %s418 = smul.addr %s417, 128
          %s419 = scalar_lea.hbm %s0, %s418
          %s421 = sshll.u32 %s413, 4
          %s422 = int_to_ptr.vmem [resolvable:$true] %s421
          %424 = dma.hbm_to_vmem [thread:$0]  %s419, 128, %s422, %s410
        $region52: #{tpu_custom_call.1} parent=47 // pred_fallthru
          _
        // Predicated region
        $region53: #{tpu_custom_call.1} parent=47 // pred_check
          %p425 = pneg %p89
        $region54: #{tpu_custom_call.1} parent=47 // pred_check_branch
          %427 = sbr.rel (%p425) target = $region56
        $region55: #{tpu_custom_call.1} parent=47 // pred_region
          %s428 = sand.u32 %s29, 1
          %s429 = scalar_lea.sflag [#allocation10], %s428
          %s430 = sand.u32 %s79, 1
          %s431 = smul.addr %s430, 8
          %s432 = scalar_lea.vmem [#allocation9], %s431
          %s434 = ssub.s32 128, 128
          %435 = vsyncadd %s429, %s434
          %s436 = smul.addr %s36, 128
          %s437 = scalar_lea.hbm %s1, %s436
          %s439 = sshll.u32 %s432, 4
          %s440 = int_to_ptr.vmem [resolvable:$true] %s439
          %442 = dma.hbm_to_vmem [thread:$0]  %s437, 128, %s440, %s429
        $region56: #{tpu_custom_call.1} parent=47 // pred_fallthru
          _
      $region48: #{tpu_custom_call.1} parent=5 // pred_fallthru
        _
      %p443 = scmp.le.s32.totalorder 1, %s29
      %p444 = scmp.lt.s32.totalorder %s29, 3
      %p445 = pnand %p443, %p444
      %p446 = pneg %p445
      // Predicated region
      $region57: #{tpu_custom_call.1} parent=5 // pred_check
        _
      $region58: #{tpu_custom_call.1} parent=5 // pred_check_branch
        %448 = sbr.rel (%p445) target = $region60
      $region59: #{tpu_custom_call.1} parent=5 // pred_region
        %s449 = ssub.s32 %s29, 1
        %s450 = sand.u32 %s56, 1
        %s451 = scalar_lea.sflag [#allocation7], %s450
        %s452 = sand.u32 %s56, 1
        %s453 = smul.addr %s452, 8
        %s454 = scalar_lea.vmem [#allocation6], %s453
        // Predicated region
        $region61: #{tpu_custom_call.1} parent=59 // pred_check
          %p455 = pneg %p69
        $region62: #{tpu_custom_call.1} parent=59 // pred_check_branch
          %457 = sbr.rel (%p455) target = $region64
        $region63: #{tpu_custom_call.1} parent=59 // pred_region
          %458 = dma.done %s451, 128
        $region64: #{tpu_custom_call.1} parent=59 // pred_fallthru
          _
        %s459 = sand.u32 %s34, 1
        %s460 = scalar_lea.sflag [#allocation10], %s459
        %s461 = sand.u32 %s82, 1
        %s462 = smul.addr %s461, 8
        %s463 = scalar_lea.vmem [#allocation9], %s462
        // Predicated region
        $region65: #{tpu_custom_call.1} parent=59 // pred_check
          %p464 = pneg %p95
        $region66: #{tpu_custom_call.1} parent=59 // pred_check_branch
          %466 = sbr.rel (%p464) target = $region68
        $region67: #{tpu_custom_call.1} parent=59 // pred_region
          %467 = dma.done %s460, 128
        $region68: #{tpu_custom_call.1} parent=59 // pred_fallthru
          _
        // Predicated region
        $region69: #{tpu_custom_call.1} parent=59 // pred_check
          %p468 = pneg %p116
        $region70: #{tpu_custom_call.1} parent=59 // pred_check_branch
          %470 = sbr.rel (%p468) target = $region72
        $region71: #{tpu_custom_call.1} parent=59 // pred_region
          %471 = dma.done [#allocation10], 512
        $region72: #{tpu_custom_call.1} parent=59 // pred_fallthru
          _
        // Predicated region
        $region73: #{tpu_custom_call.1} parent=59 // pred_check
          %p472 = pneg %p137
        $region74: #{tpu_custom_call.1} parent=59 // pred_check_branch
          %474 = sbr.rel (%p472) target = $region76
        $region75: #{tpu_custom_call.1} parent=59 // pred_region
          %475 = dma.done [#allocation13], 16
        $region76: #{tpu_custom_call.1} parent=59 // pred_fallthru
          _
        // Predicated region
        $region77: #{tpu_custom_call.1} parent=59 // pred_check
          %p476 = pneg %p158
        $region78: #{tpu_custom_call.1} parent=59 // pred_check_branch
          %478 = sbr.rel (%p476) target = $region80
        $region79: #{tpu_custom_call.1} parent=59 // pred_region
          %479 = dma.done [#allocation13], 512
        $region80: #{tpu_custom_call.1} parent=59 // pred_fallthru
          _
        // Predicated region
        $region81: #{tpu_custom_call.1} parent=59 // pred_check
          %p480 = pneg %p179
        $region82: #{tpu_custom_call.1} parent=59 // pred_check_branch
          %482 = sbr.rel (%p480) target = $region84
        $region83: #{tpu_custom_call.1} parent=59 // pred_region
          %483 = dma.done [#allocation16], 16
        $region84: #{tpu_custom_call.1} parent=59 // pred_fallthru
          _
        // Predicated region
        $region85: #{tpu_custom_call.1} parent=59 // pred_check
          %p484 = pneg %p200
        $region86: #{tpu_custom_call.1} parent=59 // pred_check_branch
          %486 = sbr.rel (%p484) target = $region88
        $region87: #{tpu_custom_call.1} parent=59 // pred_region
          %487 = dma.done [#allocation16], 512
        $region88: #{tpu_custom_call.1} parent=59 // pred_fallthru
          _
        // Predicated region
        $region89: #{tpu_custom_call.1} parent=59 // pred_check
          %p488 = pneg %p221
        $region90: #{tpu_custom_call.1} parent=59 // pred_check_branch
          %490 = sbr.rel (%p488) target = $region92
        $region91: #{tpu_custom_call.1} parent=59 // pred_region
          %491 = dma.done [#allocation19], 16
        $region92: #{tpu_custom_call.1} parent=59 // pred_fallthru
          _
        // Predicated region
        $region93: #{tpu_custom_call.1} parent=59 // pred_check
          %p492 = pneg %p242
        $region94: #{tpu_custom_call.1} parent=59 // pred_check_branch
          %494 = sbr.rel (%p492) target = $region96
        $region95: #{tpu_custom_call.1} parent=59 // pred_region
          %495 = dma.done [#allocation19], 512
        $region96: #{tpu_custom_call.1} parent=59 // pred_fallthru
          _
        // Predicated region
        $region97: #{tpu_custom_call.1} parent=59 // pred_check
          %p496 = pneg %p263
        $region98: #{tpu_custom_call.1} parent=59 // pred_check_branch
          %498 = sbr.rel (%p496) target = $region100
        $region99: #{tpu_custom_call.1} parent=59 // pred_region
          %499 = dma.done [#allocation22], 16
        $region100: #{tpu_custom_call.1} parent=59 // pred_fallthru
          _
        %s500 = sand.u32 %s56, 1
        %s501 = scalar_lea.sflag [#allocation7], %s500
        %s502 = sand.u32 %s56, 1
        %s503 = smul.addr %s502, 8
        %s504 = scalar_lea.vmem [#allocation6], %s503
        %p505 = pneg %p69
        %p506 = pneg %p66
        %s507 = sand.u32 %s34, 1
        %s508 = scalar_lea.sflag [#allocation10], %s507
        %s509 = sand.u32 %s82, 1
        %s510 = smul.addr %s509, 8
        %s511 = scalar_lea.vmem [#allocation9], %s510
        %p512 = pneg %p95
        %p513 = pneg %p92
        %p514 = pneg %p116
        %p515 = pneg %p113
        %p516 = pneg %p137
        %p517 = pneg %p134
        %p518 = pneg %p158
        %p519 = pneg %p155
        %p520 = pneg %p179
        %p521 = pneg %p176
        %p522 = pneg %p200
        %p523 = pneg %p197
        %p524 = pneg %p221
        %p525 = pneg %p218
        %p526 = pneg %p242
        %p527 = pneg %p239
        %p528 = pneg %p263
        %p529 = pneg %p260
        %p530 = pneg %p291
        %p531 = pneg %p288
        %s532 = sand.u32 %s278, 1
        %s533 = scalar_lea.sflag [#allocation8], %s532
        %s534 = sand.u32 %s278, 1
        %s535 = smul.addr %s534, 8
        %s536 = scalar_lea.vmem [#allocation23], %s535
        %p537 = scmp.eq.s32.totalorder %s39, 0
        // Predicated region
        $region101: #{tpu_custom_call.1} parent=59 // pred_check
          %p538 = pneg %p537
        $region102: #{tpu_custom_call.1} parent=59 // pred_check_branch
          %540 = sbr.rel (%p538) target = $region104
        $region103: #{tpu_custom_call.1} parent=59 // pred_region
          %v541 = vld [vmem:[%s463] sm:$0xff]
          %v542 = vld [vmem:[#allocation14] sm:$0xff]
          %v543 = vld [vmem:[#allocation14 + $0x8] sm:$0xff]
          %v544 = vld [vmem:[#allocation14 + $0x10] sm:$0xff]
          %v545 = vld [vmem:[#allocation14 + $0x18] sm:$0xff]
          %v546 = vld [vmem:[#allocation15] sm:$0x1]
          %v548 = vlaneseq
          %v549 = vshrl.u32 %v548, 7
          %v550 = vsub.s32 0, %v549
          %v551 = vrot.slane %v546, %v550
          %vm553 = vcmask 261120
          %v555 = vsel %vm553, %v541, 0
          %557 = vmatprep.subr.mxu0 0.0
          %558 = vmatpush1.msra.mxu0 %v542
          %559 = vmatprep.subr.mxu0 0.0
          %560 = vmatpush1.msra.mxu0 %v543
          %561 = vmatprep.subr.mxu0 0.0
          %562 = vmatpush1.msra.mxu0 %v544
          %563 = vmatprep.subr.mxu0 0.0
          %564 = vmatpush1.msra.mxu0 %v545
          %565 = vmatprep.subr.mxu0 0.0
          %566 = vmatpush1.msra.mxu0 0.0
          %567 = vmatprep.subr.mxu0 0.0
          %568 = vmatpush1.msra.mxu0 0.0
          %569 = vmatprep.subr.mxu0 0.0
          %570 = vmatpush1.msra.mxu0 0.0
          %571 = vmatprep.subr.mxu0 0.0
          %572 = vmatpush1.msra.mxu0 0.0
          %573 = vmatprep.subr.mxu0 0.0
          %574 = vmatpush1.msra.mxu0 0.0
          %575 = vmatprep.subr.mxu0 0.0
          %576 = vmatpush1.msra.mxu0 0.0
          %577 = vmatprep.subr.mxu0 0.0
          %578 = vmatpush1.msra.mxu0 0.0
          %579 = vmatprep.subr.mxu0 0.0
          %580 = vmatpush1.msra.mxu0 0.0
          %581 = vmatprep.subr.mxu0 0.0
          %582 = vmatpush1.msra.mxu0 0.0
          %583 = vmatprep.subr.mxu0 0.0
          %584 = vmatpush1.msra.mxu0 0.0
          %585 = vmatprep.subr.mxu0 0.0
          %586 = vmatpush1.msra.mxu0 0.0
          %587 = vmatprep.subr.mxu0 0.0
          %588 = vmatpush1.msra.mxu0 0.0
          %589 = vmatprep.subr.mxu0 0.0
          %590 = vmatpush1.msra.mxu0 0.0
          %591 = vmatprep.subr.mxu0 0.0
          %592 = vmatpush1.msra.mxu0 0.0
          %593 = vmatprep.subr.mxu0 0.0
          %594 = vmatpush1.msra.mxu0 0.0
          %595 = vmatprep.subr.mxu0 0.0
          %596 = vmatpush1.msra.mxu0 0.0
          %597 = vmatprep.subr.mxu0 0.0
          %598 = vmatpush1.msra.mxu0 0.0
          %599 = vmatprep.subr.mxu0 0.0
          %600 = vmatpush1.msra.mxu0 0.0
          %601 = vmatprep.subr.mxu0 0.0
          %602 = vmatpush1.msra.mxu0 0.0
          %603 = vmatprep.subr.mxu0 0.0
          %604 = vmatpush1.msra.mxu0 0.0
          %605 = vmatprep.subr.mxu0 0.0
          %606 = vmatpush1.msra.mxu0 0.0
          %607 = vmatprep.subr.mxu0 0.0
          %608 = vmatpush1.msra.mxu0 0.0
          %609 = vmatprep.subr.mxu0 0.0
          %610 = vmatpush1.msra.mxu0 0.0
          %611 = vmatprep.subr.mxu0 0.0
          %612 = vmatpush1.msra.mxu0 0.0
          %613 = vmatprep.subr.mxu0 0.0
          %614 = vmatpush1.msra.mxu0 0.0
          %615 = vmatprep.subr.mxu0 0.0
          %616 = vmatpush1.msra.mxu0 0.0
          %617 = vmatprep.subr.mxu0 0.0
          %618 = vmatpush1.msra.mxu0 0.0
          %619 = vmatprep.subr.mxu0 0.0
          %620 = vmatpush1.msra.mxu0 0.0
          %621 = vmatprep.mubr.f32.mxu0 0.0
          %622 = vmatmul.mubr.f32.gmra.mrb[0].mxu0 %v555
          %v623 = vpop.f32.mrb[0].mxu0
          %v624 = vadd.f32 %v551, %v623
          %v625 = vpop.f32.mrb[0].mxu0
          %626 = vdwg.mxu0
          %627 = vst.msk [vmem:[#allocation3] sm:$0xff] %vm553, %v624
          %v628 = vld [vmem:[#allocation17] sm:$0xff]
          %v629 = vld [vmem:[#allocation17 + $0x8] sm:$0xff]
          %v630 = vld [vmem:[#allocation17 + $0x10] sm:$0xff]
          %v631 = vld [vmem:[#allocation17 + $0x18] sm:$0xff]
          %v632 = vld [vmem:[#allocation18] sm:$0x1]
          %v634 = vlaneseq
          %v635 = vshrl.u32 %v634, 7
          %v636 = vsub.s32 0, %v635
          %v637 = vrot.slane %v632, %v636
          %639 = vmatprep.subr.mxu0 0.0
          %640 = vmatpush1.msra.mxu0 %v628
          %641 = vmatprep.subr.mxu0 0.0
          %642 = vmatpush1.msra.mxu0 %v629
          %643 = vmatprep.subr.mxu0 0.0
          %644 = vmatpush1.msra.mxu0 %v630
          %645 = vmatprep.subr.mxu0 0.0
          %646 = vmatpush1.msra.mxu0 %v631
          %647 = vmatprep.subr.mxu0 0.0
          %648 = vmatpush1.msra.mxu0 0.0
          %649 = vmatprep.subr.mxu0 0.0
          %650 = vmatpush1.msra.mxu0 0.0
          %651 = vmatprep.subr.mxu0 0.0
          %652 = vmatpush1.msra.mxu0 0.0
          %653 = vmatprep.subr.mxu0 0.0
          %654 = vmatpush1.msra.mxu0 0.0
          %655 = vmatprep.subr.mxu0 0.0
          %656 = vmatpush1.msra.mxu0 0.0
          %657 = vmatprep.subr.mxu0 0.0
          %658 = vmatpush1.msra.mxu0 0.0
          %659 = vmatprep.subr.mxu0 0.0
          %660 = vmatpush1.msra.mxu0 0.0
          %661 = vmatprep.subr.mxu0 0.0
          %662 = vmatpush1.msra.mxu0 0.0
          %663 = vmatprep.subr.mxu0 0.0
          %664 = vmatpush1.msra.mxu0 0.0
          %665 = vmatprep.subr.mxu0 0.0
          %666 = vmatpush1.msra.mxu0 0.0
          %667 = vmatprep.subr.mxu0 0.0
          %668 = vmatpush1.msra.mxu0 0.0
          %669 = vmatprep.subr.mxu0 0.0
          %670 = vmatpush1.msra.mxu0 0.0
          %671 = vmatprep.subr.mxu0 0.0
          %672 = vmatpush1.msra.mxu0 0.0
          %673 = vmatprep.subr.mxu0 0.0
          %674 = vmatpush1.msra.mxu0 0.0
          %675 = vmatprep.subr.mxu0 0.0
          %676 = vmatpush1.msra.mxu0 0.0
          %677 = vmatprep.subr.mxu0 0.0
          %678 = vmatpush1.msra.mxu0 0.0
          %679 = vmatprep.subr.mxu0 0.0
          %680 = vmatpush1.msra.mxu0 0.0
          %681 = vmatprep.subr.mxu0 0.0
          %682 = vmatpush1.msra.mxu0 0.0
          %683 = vmatprep.subr.mxu0 0.0
          %684 = vmatpush1.msra.mxu0 0.0
          %685 = vmatprep.subr.mxu0 0.0
          %686 = vmatpush1.msra.mxu0 0.0
          %687 = vmatprep.subr.mxu0 0.0
          %688 = vmatpush1.msra.mxu0 0.0
          %689 = vmatprep.subr.mxu0 0.0
          %690 = vmatpush1.msra.mxu0 0.0
          %691 = vmatprep.subr.mxu0 0.0
          %692 = vmatpush1.msra.mxu0 0.0
          %693 = vmatprep.subr.mxu0 0.0
          %694 = vmatpush1.msra.mxu0 0.0
          %695 = vmatprep.subr.mxu0 0.0
          %696 = vmatpush1.msra.mxu0 0.0
          %697 = vmatprep.subr.mxu0 0.0
          %698 = vmatpush1.msra.mxu0 0.0
          %699 = vmatprep.subr.mxu0 0.0
          %700 = vmatpush1.msra.mxu0 0.0
          %701 = vmatprep.subr.mxu0 0.0
          %702 = vmatpush1.msra.mxu0 0.0
          %703 = vmatprep.mubr.f32.mxu0 0.0
          %704 = vmatmul.mubr.f32.gmra.mrb[0].mxu0 %v555
          %v705 = vpop.f32.mrb[0].mxu0
          %v706 = vadd.f32 %v637, %v705
          %v707 = vpop.f32.mrb[0].mxu0
          %708 = vdwg.mxu0
          %709 = vst.msk [vmem:[#allocation4] sm:$0xff] %vm553, %v706
        $region104: #{tpu_custom_call.1} parent=59 // pred_fallthru
          _
        %v710 = vld [vmem:[%s454] sm:$0xff]
        %v711 = vld [vmem:[#allocation11] sm:$0xff]
        %v712 = vld [vmem:[#allocation11 + $0x8] sm:$0xff]
        %v713 = vld [vmem:[#allocation11 + $0x10] sm:$0xff]
        %v714 = vld [vmem:[#allocation11 + $0x18] sm:$0xff]
        %v715 = vld [vmem:[#allocation12] sm:$0x1]
        %v717 = vlaneseq
        %v718 = vshrl.u32 %v717, 7
        %v719 = vsub.s32 0, %v718
        %v720 = vrot.slane %v715, %v719
        %vm722 = vcmask 261120
        %v724 = vsel %vm722, %v710, 0
        %726 = vmatprep.subr.mxu0 0.0
        %727 = vmatpush1.msra.mxu0 %v711
        %728 = vmatprep.subr.mxu0 0.0
        %729 = vmatpush1.msra.mxu0 %v712
        %730 = vmatprep.subr.mxu0 0.0
        %731 = vmatpush1.msra.mxu0 %v713
        %732 = vmatprep.subr.mxu0 0.0
        %733 = vmatpush1.msra.mxu0 %v714
        %734 = vmatprep.subr.mxu0 0.0
        %735 = vmatpush1.msra.mxu0 0.0
        %736 = vmatprep.subr.mxu0 0.0
        %737 = vmatpush1.msra.mxu0 0.0
        %738 = vmatprep.subr.mxu0 0.0
        %739 = vmatpush1.msra.mxu0 0.0
        %740 = vmatprep.subr.mxu0 0.0
        %741 = vmatpush1.msra.mxu0 0.0
        %742 = vmatprep.subr.mxu0 0.0
        %743 = vmatpush1.msra.mxu0 0.0
        %744 = vmatprep.subr.mxu0 0.0
        %745 = vmatpush1.msra.mxu0 0.0
        %746 = vmatprep.subr.mxu0 0.0
        %747 = vmatpush1.msra.mxu0 0.0
        %748 = vmatprep.subr.mxu0 0.0
        %749 = vmatpush1.msra.mxu0 0.0
        %750 = vmatprep.subr.mxu0 0.0
        %751 = vmatpush1.msra.mxu0 0.0
        %752 = vmatprep.subr.mxu0 0.0
        %753 = vmatpush1.msra.mxu0 0.0
        %754 = vmatprep.subr.mxu0 0.0
        %755 = vmatpush1.msra.mxu0 0.0
        %756 = vmatprep.subr.mxu0 0.0
        %757 = vmatpush1.msra.mxu0 0.0
        %758 = vmatprep.subr.mxu0 0.0
        %759 = vmatpush1.msra.mxu0 0.0
        %760 = vmatprep.subr.mxu0 0.0
        %761 = vmatpush1.msra.mxu0 0.0
        %762 = vmatprep.subr.mxu0 0.0
        %763 = vmatpush1.msra.mxu0 0.0
        %764 = vmatprep.subr.mxu0 0.0
        %765 = vmatpush1.msra.mxu0 0.0
        %766 = vmatprep.subr.mxu0 0.0
        %767 = vmatpush1.msra.mxu0 0.0
        %768 = vmatprep.subr.mxu0 0.0
        %769 = vmatpush1.msra.mxu0 0.0
        %770 = vmatprep.subr.mxu0 0.0
        %771 = vmatpush1.msra.mxu0 0.0
        %772 = vmatprep.subr.mxu0 0.0
        %773 = vmatpush1.msra.mxu0 0.0
        %774 = vmatprep.subr.mxu0 0.0
        %775 = vmatpush1.msra.mxu0 0.0
        %776 = vmatprep.subr.mxu0 0.0
        %777 = vmatpush1.msra.mxu0 0.0
        %778 = vmatprep.subr.mxu0 0.0
        %779 = vmatpush1.msra.mxu0 0.0
        %780 = vmatprep.subr.mxu0 0.0
        %781 = vmatpush1.msra.mxu0 0.0
        %782 = vmatprep.subr.mxu0 0.0
        %783 = vmatpush1.msra.mxu0 0.0
        %784 = vmatprep.subr.mxu0 0.0
        %785 = vmatpush1.msra.mxu0 0.0
        %786 = vmatprep.subr.mxu0 0.0
        %787 = vmatpush1.msra.mxu0 0.0
        %788 = vmatprep.subr.mxu0 0.0
        %789 = vmatpush1.msra.mxu0 0.0
        %790 = vmatprep.mubr.f32.mxu0 0.0
        %791 = vmatmul.mubr.f32.gmra.mrb[0].mxu0 %v724
        %v792 = vpop.f32.mrb[0].mxu0
        %v793 = vadd.f32 %v720, %v792
        %v794 = vpop.f32.mrb[0].mxu0
        %795 = vdwg.mxu0
        %v796 = vmul.f32 %v793, 0.35355338
        %797 = vst.msk [vmem:[#allocation2] sm:$0xff] %vm722, %v796
        %v798 = vld [vmem:[#allocation2] sm:$0xff]
        %v799 = vld [vmem:[#allocation3] sm:$0xff]
        %v800 = vld [vmem:[#allocation4] sm:$0xff]
        %vm801 = vcmask 64512
        %v803 = vsel %vm801, %v798, 0
        %v806 = vsel %vm801, %v799, 0
        %808 = vmatprep.subr.mxu0 0.0
        %809 = vmatpush1.xpose.msra.mxu0 %v806
        %810 = vmatprep.subr.mxu0 0.0
        %811 = vmatpush1.xpose.msra.mxu0 0.0
        %812 = vmatprep.subr.mxu0 0.0
        %813 = vmatpush1.xpose.msra.mxu0 0.0
        %814 = vmatprep.subr.mxu0 0.0
        %815 = vmatpush1.xpose.msra.mxu0 0.0
        %816 = vmatprep.subr.mxu0 0.0
        %817 = vmatpush1.xpose.msra.mxu0 0.0
        %818 = vmatprep.subr.mxu0 0.0
        %819 = vmatpush1.xpose.msra.mxu0 0.0
        %820 = vmatprep.subr.mxu0 0.0
        %821 = vmatpush1.xpose.msra.mxu0 0.0
        %822 = vmatprep.subr.mxu0 0.0
        %823 = vmatpush1.xpose.msra.mxu0 0.0
        %824 = vmatprep.subr.mxu0 0.0
        %825 = vmatpush1.xpose.msra.mxu0 0.0
        %826 = vmatprep.subr.mxu0 0.0
        %827 = vmatpush1.xpose.msra.mxu0 0.0
        %828 = vmatprep.subr.mxu0 0.0
        %829 = vmatpush1.xpose.msra.mxu0 0.0
        %830 = vmatprep.subr.mxu0 0.0
        %831 = vmatpush1.xpose.msra.mxu0 0.0
        %832 = vmatprep.subr.mxu0 0.0
        %833 = vmatpush1.xpose.msra.mxu0 0.0
        %834 = vmatprep.subr.mxu0 0.0
        %835 = vmatpush1.xpose.msra.mxu0 0.0
        %836 = vmatprep.subr.mxu0 0.0
        %837 = vmatpush1.xpose.msra.mxu0 0.0
        %838 = vmatprep.subr.mxu0 0.0
        %839 = vmatpush1.xpose.msra.mxu0 0.0
        %840 = vmatprep.subr.mxu0 0.0
        %841 = vmatpush1.xpose.msra.mxu0 0.0
        %842 = vmatprep.subr.mxu0 0.0
        %843 = vmatpush1.xpose.msra.mxu0 0.0
        %844 = vmatprep.subr.mxu0 0.0
        %845 = vmatpush1.xpose.msra.mxu0 0.0
        %846 = vmatprep.subr.mxu0 0.0
        %847 = vmatpush1.xpose.msra.mxu0 0.0
        %848 = vmatprep.subr.mxu0 0.0
        %849 = vmatpush1.xpose.msra.mxu0 0.0
        %850 = vmatprep.subr.mxu0 0.0
        %851 = vmatpush1.xpose.msra.mxu0 0.0
        %852 = vmatprep.subr.mxu0 0.0
        %853 = vmatpush1.xpose.msra.mxu0 0.0
        %854 = vmatprep.subr.mxu0 0.0
        %855 = vmatpush1.xpose.msra.mxu0 0.0
        %856 = vmatprep.subr.mxu0 0.0
        %857 = vmatpush1.xpose.msra.mxu0 0.0
        %858 = vmatprep.subr.mxu0 0.0
        %859 = vmatpush1.xpose.msra.mxu0 0.0
        %860 = vmatprep.subr.mxu0 0.0
        %861 = vmatpush1.xpose.msra.mxu0 0.0
        %862 = vmatprep.subr.mxu0 0.0
        %863 = vmatpush1.xpose.msra.mxu0 0.0
        %864 = vmatprep.subr.mxu0 0.0
        %865 = vmatpush1.xpose.msra.mxu0 0.0
        %866 = vmatprep.subr.mxu0 0.0
        %867 = vmatpush1.xpose.msra.mxu0 0.0
        %868 = vmatprep.subr.mxu0 0.0
        %869 = vmatpush1.xpose.msra.mxu0 0.0
        %870 = vmatprep.subr.mxu0 0.0
        %871 = vmatpush1.xpose.msra.mxu0 0.0
        %872 = vmatprep.mubr.f32.mxu0 0.0
        %873 = vmatmul.mubr.f32.gmra.mrb[0].mxu0 %v803
        %v874 = vpop.f32.mrb[0].mxu0
        %v875 = vadd.f32 0.0, %v874
        %v876 = vpop.f32.mrb[0].mxu0
        %877 = vdwg.mxu0
        %v878 = vsel %vm801, %v875, -inf
        %879 = vmax.xlane.f32.xlu0 %v878
        %v880 = vpop.xlane.xlu0 %879
        %v881 = vsub.f32 %v875, %v880
        %v882 = vmul.f32 %v881, 1.442695
        %v883 = vpow.pop %v882
        %v884 = vsel %vm801, %v883, 0.0
        %885 = vadd.xlane.f32.xlu0 %v884
        %v886 = vpop.xlane.xlu0 %885
        %v888 = vsel %vm801, %v883, 0
        %890 = vmatprep.subr.mxu0 0.0
        %891 = vmatpush1.msra.mxu0 %v800
        %892 = vmatprep.subr.mxu0 0.0
        %893 = vmatpush1.msra.mxu0 0.0
        %894 = vmatprep.subr.mxu0 0.0
        %895 = vmatpush1.msra.mxu0 0.0
        %896 = vmatprep.subr.mxu0 0.0
        %897 = vmatpush1.msra.mxu0 0.0
        %898 = vmatprep.subr.mxu0 0.0
        %899 = vmatpush1.msra.mxu0 0.0
        %900 = vmatprep.subr.mxu0 0.0
        %901 = vmatpush1.msra.mxu0 0.0
        %902 = vmatprep.subr.mxu0 0.0
        %903 = vmatpush1.msra.mxu0 0.0
        %904 = vmatprep.subr.mxu0 0.0
        %905 = vmatpush1.msra.mxu0 0.0
        %906 = vmatprep.subr.mxu0 0.0
        %907 = vmatpush1.msra.mxu0 0.0
        %908 = vmatprep.subr.mxu0 0.0
        %909 = vmatpush1.msra.mxu0 0.0
        %910 = vmatprep.subr.mxu0 0.0
        %911 = vmatpush1.msra.mxu0 0.0
        %912 = vmatprep.subr.mxu0 0.0
        %913 = vmatpush1.msra.mxu0 0.0
        %914 = vmatprep.subr.mxu0 0.0
        %915 = vmatpush1.msra.mxu0 0.0
        %916 = vmatprep.subr.mxu0 0.0
        %917 = vmatpush1.msra.mxu0 0.0
        %918 = vmatprep.subr.mxu0 0.0
        %919 = vmatpush1.msra.mxu0 0.0
        %920 = vmatprep.subr.mxu0 0.0
        %921 = vmatpush1.msra.mxu0 0.0
        %922 = vmatprep.subr.mxu0 0.0
        %923 = vmatpush1.msra.mxu0 0.0
        %924 = vmatprep.subr.mxu0 0.0
        %925 = vmatpush1.msra.mxu0 0.0
        %926 = vmatprep.subr.mxu0 0.0
        %927 = vmatpush1.msra.mxu0 0.0
        %928 = vmatprep.subr.mxu0 0.0
        %929 = vmatpush1.msra.mxu0 0.0
        %930 = vmatprep.subr.mxu0 0.0
        %931 = vmatpush1.msra.mxu0 0.0
        %932 = vmatprep.subr.mxu0 0.0
        %933 = vmatpush1.msra.mxu0 0.0
        %934 = vmatprep.subr.mxu0 0.0
        %935 = vmatpush1.msra.mxu0 0.0
        %936 = vmatprep.subr.mxu0 0.0
        %937 = vmatpush1.msra.mxu0 0.0
        %938 = vmatprep.subr.mxu0 0.0
        %939 = vmatpush1.msra.mxu0 0.0
        %940 = vmatprep.subr.mxu0 0.0
        %941 = vmatpush1.msra.mxu0 0.0
        %942 = vmatprep.subr.mxu0 0.0
        %943 = vmatpush1.msra.mxu0 0.0
        %944 = vmatprep.subr.mxu0 0.0
        %945 = vmatpush1.msra.mxu0 0.0
        %946 = vmatprep.subr.mxu0 0.0
        %947 = vmatpush1.msra.mxu0 0.0
        %948 = vmatprep.subr.mxu0 0.0
        %949 = vmatpush1.msra.mxu0 0.0
        %950 = vmatprep.subr.mxu0 0.0
        %951 = vmatpush1.msra.mxu0 0.0
        %952 = vmatprep.subr.mxu0 0.0
        %953 = vmatpush1.msra.mxu0 0.0
        %954 = vmatprep.mubr.f32.mxu0 0.0
        %955 = vmatmul.mubr.f32.gmra.mrb[0].mxu0 %v888
        %v956 = vpop.f32.mrb[0].mxu0
        %v957 = vadd.f32 0.0, %v956
        %v958 = vpop.f32.mrb[0].mxu0
        %959 = vdwg.mxu0
        %v960 = vrcp.pop %v886
        %v961 = vmul.f32 %v957, %v960
        %962 = vst.msk [vmem:[#allocation5] sm:$0xff] %vm801, %v961
        %v963 = vld [vmem:[#allocation2] sm:$0xff]
        %v964 = vld [vmem:[#allocation3] sm:$0xff]
        %v965 = vld [vmem:[#allocation4] sm:$0xff]
        %967 = vrot.lane.b32.xlu0 %v963, 120
        %v968 = vpop.permute.xlu0 %967
        %970 = vrot.lane.b32.xlu0 %v964, 120
        %v971 = vpop.permute.xlu0 %970
        %v972 = vsel %vm801, %v968, 0
        %v974 = vsel %vm801, %v971, 0
        %976 = vmatprep.subr.mxu0 0.0
        %977 = vmatpush1.xpose.msra.mxu0 %v974
        %978 = vmatprep.subr.mxu0 0.0
        %979 = vmatpush1.xpose.msra.mxu0 0.0
        %980 = vmatprep.subr.mxu0 0.0
        %981 = vmatpush1.xpose.msra.mxu0 0.0
        %982 = vmatprep.subr.mxu0 0.0
        %983 = vmatpush1.xpose.msra.mxu0 0.0
        %984 = vmatprep.subr.mxu0 0.0
        %985 = vmatpush1.xpose.msra.mxu0 0.0
        %986 = vmatprep.subr.mxu0 0.0
        %987 = vmatpush1.xpose.msra.mxu0 0.0
        %988 = vmatprep.subr.mxu0 0.0
        %989 = vmatpush1.xpose.msra.mxu0 0.0
        %990 = vmatprep.subr.mxu0 0.0
        %991 = vmatpush1.xpose.msra.mxu0 0.0
        %992 = vmatprep.subr.mxu0 0.0
        %993 = vmatpush1.xpose.msra.mxu0 0.0
        %994 = vmatprep.subr.mxu0 0.0
        %995 = vmatpush1.xpose.msra.mxu0 0.0
        %996 = vmatprep.subr.mxu0 0.0
        %997 = vmatpush1.xpose.msra.mxu0 0.0
        %998 = vmatprep.subr.mxu0 0.0
        %999 = vmatpush1.xpose.msra.mxu0 0.0
        %1000 = vmatprep.subr.mxu0 0.0
        %1001 = vmatpush1.xpose.msra.mxu0 0.0
        %1002 = vmatprep.subr.mxu0 0.0
        %1003 = vmatpush1.xpose.msra.mxu0 0.0
        %1004 = vmatprep.subr.mxu0 0.0
        %1005 = vmatpush1.xpose.msra.mxu0 0.0
        %1006 = vmatprep.subr.mxu0 0.0
        %1007 = vmatpush1.xpose.msra.mxu0 0.0
        %1008 = vmatprep.subr.mxu0 0.0
        %1009 = vmatpush1.xpose.msra.mxu0 0.0
        %1010 = vmatprep.subr.mxu0 0.0
        %1011 = vmatpush1.xpose.msra.mxu0 0.0
        %1012 = vmatprep.subr.mxu0 0.0
        %1013 = vmatpush1.xpose.msra.mxu0 0.0
        %1014 = vmatprep.subr.mxu0 0.0
        %1015 = vmatpush1.xpose.msra.mxu0 0.0
        %1016 = vmatprep.subr.mxu0 0.0
        %1017 = vmatpush1.xpose.msra.mxu0 0.0
        %1018 = vmatprep.subr.mxu0 0.0
        %1019 = vmatpush1.xpose.msra.mxu0 0.0
        %1020 = vmatprep.subr.mxu0 0.0
        %1021 = vmatpush1.xpose.msra.mxu0 0.0
        %1022 = vmatprep.subr.mxu0 0.0
        %1023 = vmatpush1.xpose.msra.mxu0 0.0
        %1024 = vmatprep.subr.mxu0 0.0
        %1025 = vmatpush1.xpose.msra.mxu0 0.0
        %1026 = vmatprep.subr.mxu0 0.0
        %1027 = vmatpush1.xpose.msra.mxu0 0.0
        %1028 = vmatprep.subr.mxu0 0.0
        %1029 = vmatpush1.xpose.msra.mxu0 0.0
        %1030 = vmatprep.subr.mxu0 0.0
        %1031 = vmatpush1.xpose.msra.mxu0 0.0
        %1032 = vmatprep.subr.mxu0 0.0
        %1033 = vmatpush1.xpose.msra.mxu0 0.0
        %1034 = vmatprep.subr.mxu0 0.0
        %1035 = vmatpush1.xpose.msra.mxu0 0.0
        %1036 = vmatprep.subr.mxu0 0.0
        %1037 = vmatpush1.xpose.msra.mxu0 0.0
        %1038 = vmatprep.subr.mxu0 0.0
        %1039 = vmatpush1.xpose.msra.mxu0 0.0
        %1040 = vmatprep.mubr.f32.mxu0 0.0
        %1041 = vmatmul.mubr.f32.gmra.mrb[0].mxu0 %v972
        %v1042 = vpop.f32.mrb[0].mxu0
        %v1043 = vadd.f32 0.0, %v1042
        %v1044 = vpop.f32.mrb[0].mxu0
        %1045 = vdwg.mxu0
        %v1046 = vsel %vm801, %v1043, -inf
        %1047 = vmax.xlane.f32.xlu0 %v1046
        %v1048 = vpop.xlane.xlu0 %1047
        %v1049 = vsub.f32 %v1043, %v1048
        %v1050 = vmul.f32 %v1049, 1.442695
        %v1051 = vpow.pop %v1050
        %v1052 = vsel %vm801, %v1051, 0.0
        %1053 = vadd.xlane.f32.xlu0 %v1052
        %v1054 = vpop.xlane.xlu0 %1053
        %1056 = vrot.lane.b32.xlu0 %v965, 120
        %v1057 = vpop.permute.xlu0 %1056
        %v1060 = vsel %vm801, %v1051, 0
        %1062 = vmatprep.subr.mxu0 0.0
        %1063 = vmatpush1.msra.mxu0 %v1057
        %1064 = vmatprep.subr.mxu0 0.0
        %1065 = vmatpush1.msra.mxu0 0.0
        %1066 = vmatprep.subr.mxu0 0.0
        %1067 = vmatpush1.msra.mxu0 0.0
        %1068 = vmatprep.subr.mxu0 0.0
        %1069 = vmatpush1.msra.mxu0 0.0
        %1070 = vmatprep.subr.mxu0 0.0
        %1071 = vmatpush1.msra.mxu0 0.0
        %1072 = vmatprep.subr.mxu0 0.0
        %1073 = vmatpush1.msra.mxu0 0.0
        %1074 = vmatprep.subr.mxu0 0.0
        %1075 = vmatpush1.msra.mxu0 0.0
        %1076 = vmatprep.subr.mxu0 0.0
        %1077 = vmatpush1.msra.mxu0 0.0
        %1078 = vmatprep.subr.mxu0 0.0
        %1079 = vmatpush1.msra.mxu0 0.0
        %1080 = vmatprep.subr.mxu0 0.0
        %1081 = vmatpush1.msra.mxu0 0.0
        %1082 = vmatprep.subr.mxu0 0.0
        %1083 = vmatpush1.msra.mxu0 0.0
        %1084 = vmatprep.subr.mxu0 0.0
        %1085 = vmatpush1.msra.mxu0 0.0
        %1086 = vmatprep.subr.mxu0 0.0
        %1087 = vmatpush1.msra.mxu0 0.0
        %1088 = vmatprep.subr.mxu0 0.0
        %1089 = vmatpush1.msra.mxu0 0.0
        %1090 = vmatprep.subr.mxu0 0.0
        %1091 = vmatpush1.msra.mxu0 0.0
        %1092 = vmatprep.subr.mxu0 0.0
        %1093 = vmatpush1.msra.mxu0 0.0
        %1094 = vmatprep.subr.mxu0 0.0
        %1095 = vmatpush1.msra.mxu0 0.0
        %1096 = vmatprep.subr.mxu0 0.0
        %1097 = vmatpush1.msra.mxu0 0.0
        %1098 = vmatprep.subr.mxu0 0.0
        %1099 = vmatpush1.msra.mxu0 0.0
        %1100 = vmatprep.subr.mxu0 0.0
        %1101 = vmatpush1.msra.mxu0 0.0
        %1102 = vmatprep.subr.mxu0 0.0
        %1103 = vmatpush1.msra.mxu0 0.0
        %1104 = vmatprep.subr.mxu0 0.0
        %1105 = vmatpush1.msra.mxu0 0.0
        %1106 = vmatprep.subr.mxu0 0.0
        %1107 = vmatpush1.msra.mxu0 0.0
        %1108 = vmatprep.subr.mxu0 0.0
        %1109 = vmatpush1.msra.mxu0 0.0
        %1110 = vmatprep.subr.mxu0 0.0
        %1111 = vmatpush1.msra.mxu0 0.0
        %1112 = vmatprep.subr.mxu0 0.0
        %1113 = vmatpush1.msra.mxu0 0.0
        %1114 = vmatprep.subr.mxu0 0.0
        %1115 = vmatpush1.msra.mxu0 0.0
        %1116 = vmatprep.subr.mxu0 0.0
        %1117 = vmatpush1.msra.mxu0 0.0
        %1118 = vmatprep.subr.mxu0 0.0
        %1119 = vmatpush1.msra.mxu0 0.0
        %1120 = vmatprep.subr.mxu0 0.0
        %1121 = vmatpush1.msra.mxu0 0.0
        %1122 = vmatprep.subr.mxu0 0.0
        %1123 = vmatpush1.msra.mxu0 0.0
        %1124 = vmatprep.subr.mxu0 0.0
        %1125 = vmatpush1.msra.mxu0 0.0
        %1126 = vmatprep.mubr.f32.mxu0 0.0
        %1127 = vmatmul.mubr.f32.gmra.mrb[0].mxu0 %v1060
        %v1128 = vpop.f32.mrb[0].mxu0
        %v1129 = vadd.f32 0.0, %v1128
        %v1130 = vpop.f32.mrb[0].mxu0
        %1131 = vdwg.mxu0
        %v1132 = vrcp.pop %v1054
        %v1133 = vmul.f32 %v1129, %v1132
        %1135 = vrot.lane.b32.xlu0 %v1133, 8
        %v1136 = vpop.permute.xlu0 %1135
        %vm1138 = vcmask 130112
        %1139 = vst.msk [vmem:[#allocation5] sm:$0xff] %vm1138, %v1136
        %v1140 = vld [vmem:[#allocation2] sm:$0xff]
        %v1141 = vld [vmem:[#allocation3] sm:$0xff]
        %v1142 = vld [vmem:[#allocation4] sm:$0xff]
        %1144 = vrot.lane.b32.xlu0 %v1140, 112
        %v1145 = vpop.permute.xlu0 %1144
        %1147 = vrot.lane.b32.xlu0 %v1141, 112
        %v1148 = vpop.permute.xlu0 %1147
        %v1149 = vsel %vm801, %v1145, 0
        %v1151 = vsel %vm801, %v1148, 0
        %1153 = vmatprep.subr.mxu0 0.0
        %1154 = vmatpush1.xpose.msra.mxu0 %v1151
        %1155 = vmatprep.subr.mxu0 0.0
        %1156 = vmatpush1.xpose.msra.mxu0 0.0
        %1157 = vmatprep.subr.mxu0 0.0
        %1158 = vmatpush1.xpose.msra.mxu0 0.0
        %1159 = vmatprep.subr.mxu0 0.0
        %1160 = vmatpush1.xpose.msra.mxu0 0.0
        %1161 = vmatprep.subr.mxu0 0.0
        %1162 = vmatpush1.xpose.msra.mxu0 0.0
        %1163 = vmatprep.subr.mxu0 0.0
        %1164 = vmatpush1.xpose.msra.mxu0 0.0
        %1165 = vmatprep.subr.mxu0 0.0
        %1166 = vmatpush1.xpose.msra.mxu0 0.0
        %1167 = vmatprep.subr.mxu0 0.0
        %1168 = vmatpush1.xpose.msra.mxu0 0.0
        %1169 = vmatprep.subr.mxu0 0.0
        %1170 = vmatpush1.xpose.msra.mxu0 0.0
        %1171 = vmatprep.subr.mxu0 0.0
        %1172 = vmatpush1.xpose.msra.mxu0 0.0
        %1173 = vmatprep.subr.mxu0 0.0
        %1174 = vmatpush1.xpose.msra.mxu0 0.0
        %1175 = vmatprep.subr.mxu0 0.0
        %1176 = vmatpush1.xpose.msra.mxu0 0.0
        %1177 = vmatprep.subr.mxu0 0.0
        %1178 = vmatpush1.xpose.msra.mxu0 0.0
        %1179 = vmatprep.subr.mxu0 0.0
        %1180 = vmatpush1.xpose.msra.mxu0 0.0
        %1181 = vmatprep.subr.mxu0 0.0
        %1182 = vmatpush1.xpose.msra.mxu0 0.0
        %1183 = vmatprep.subr.mxu0 0.0
        %1184 = vmatpush1.xpose.msra.mxu0 0.0
        %1185 = vmatprep.subr.mxu0 0.0
        %1186 = vmatpush1.xpose.msra.mxu0 0.0
        %1187 = vmatprep.subr.mxu0 0.0
        %1188 = vmatpush1.xpose.msra.mxu0 0.0
        %1189 = vmatprep.subr.mxu0 0.0
        %1190 = vmatpush1.xpose.msra.mxu0 0.0
        %1191 = vmatprep.subr.mxu0 0.0
        %1192 = vmatpush1.xpose.msra.mxu0 0.0
        %1193 = vmatprep.subr.mxu0 0.0
        %1194 = vmatpush1.xpose.msra.mxu0 0.0
        %1195 = vmatprep.subr.mxu0 0.0
        %1196 = vmatpush1.xpose.msra.mxu0 0.0
        %1197 = vmatprep.subr.mxu0 0.0
        %1198 = vmatpush1.xpose.msra.mxu0 0.0
        %1199 = vmatprep.subr.mxu0 0.0
        %1200 = vmatpush1.xpose.msra.mxu0 0.0
        %1201 = vmatprep.subr.mxu0 0.0
        %1202 = vmatpush1.xpose.msra.mxu0 0.0
        %1203 = vmatprep.subr.mxu0 0.0
        %1204 = vmatpush1.xpose.msra.mxu0 0.0
        %1205 = vmatprep.subr.mxu0 0.0
        %1206 = vmatpush1.xpose.msra.mxu0 0.0
        %1207 = vmatprep.subr.mxu0 0.0
        %1208 = vmatpush1.xpose.msra.mxu0 0.0
        %1209 = vmatprep.subr.mxu0 0.0
        %1210 = vmatpush1.xpose.msra.mxu0 0.0
        %1211 = vmatprep.subr.mxu0 0.0
        %1212 = vmatpush1.xpose.msra.mxu0 0.0
        %1213 = vmatprep.subr.mxu0 0.0
        %1214 = vmatpush1.xpose.msra.mxu0 0.0
        %1215 = vmatprep.subr.mxu0 0.0
        %1216 = vmatpush1.xpose.msra.mxu0 0.0
        %1217 = vmatprep.mubr.f32.mxu0 0.0
        %1218 = vmatmul.mubr.f32.gmra.mrb[0].mxu0 %v1149
        %v1219 = vpop.f32.mrb[0].mxu0
        %v1220 = vadd.f32 0.0, %v1219
        %v1221 = vpop.f32.mrb[0].mxu0
        %1222 = vdwg.mxu0
        %v1223 = vsel %vm801, %v1220, -inf
        %1224 = vmax.xlane.f32.xlu0 %v1223
        %v1225 = vpop.xlane.xlu0 %1224
        %v1226 = vsub.f32 %v1220, %v1225
        %v1227 = vmul.f32 %v1226, 1.442695
        %v1228 = vpow.pop %v1227
        %v1229 = vsel %vm801, %v1228, 0.0
        %1230 = vadd.xlane.f32.xlu0 %v1229
        %v1231 = vpop.xlane.xlu0 %1230
        %1233 = vrot.lane.b32.xlu0 %v1142, 112
        %v1234 = vpop.permute.xlu0 %1233
        %v1237 = vsel %vm801, %v1228, 0
        %1239 = vmatprep.subr.mxu0 0.0
        %1240 = vmatpush1.msra.mxu0 %v1234
        %1241 = vmatprep.subr.mxu0 0.0
        %1242 = vmatpush1.msra.mxu0 0.0
        %1243 = vmatprep.subr.mxu0 0.0
        %1244 = vmatpush1.msra.mxu0 0.0
        %1245 = vmatprep.subr.mxu0 0.0
        %1246 = vmatpush1.msra.mxu0 0.0
        %1247 = vmatprep.subr.mxu0 0.0
        %1248 = vmatpush1.msra.mxu0 0.0
        %1249 = vmatprep.subr.mxu0 0.0
        %1250 = vmatpush1.msra.mxu0 0.0
        %1251 = vmatprep.subr.mxu0 0.0
        %1252 = vmatpush1.msra.mxu0 0.0
        %1253 = vmatprep.subr.mxu0 0.0
        %1254 = vmatpush1.msra.mxu0 0.0
        %1255 = vmatprep.subr.mxu0 0.0
        %1256 = vmatpush1.msra.mxu0 0.0
        %1257 = vmatprep.subr.mxu0 0.0
        %1258 = vmatpush1.msra.mxu0 0.0
        %1259 = vmatprep.subr.mxu0 0.0
        %1260 = vmatpush1.msra.mxu0 0.0
        %1261 = vmatprep.subr.mxu0 0.0
        %1262 = vmatpush1.msra.mxu0 0.0
        %1263 = vmatprep.subr.mxu0 0.0
        %1264 = vmatpush1.msra.mxu0 0.0
        %1265 = vmatprep.subr.mxu0 0.0
        %1266 = vmatpush1.msra.mxu0 0.0
        %1267 = vmatprep.subr.mxu0 0.0
        %1268 = vmatpush1.msra.mxu0 0.0
        %1269 = vmatprep.subr.mxu0 0.0
        %1270 = vmatpush1.msra.mxu0 0.0
        %1271 = vmatprep.subr.mxu0 0.0
        %1272 = vmatpush1.msra.mxu0 0.0
        %1273 = vmatprep.subr.mxu0 0.0
        %1274 = vmatpush1.msra.mxu0 0.0
        %1275 = vmatprep.subr.mxu0 0.0
        %1276 = vmatpush1.msra.mxu0 0.0
        %1277 = vmatprep.subr.mxu0 0.0
        %1278 = vmatpush1.msra.mxu0 0.0
        %1279 = vmatprep.subr.mxu0 0.0
        %1280 = vmatpush1.msra.mxu0 0.0
        %1281 = vmatprep.subr.mxu0 0.0
        %1282 = vmatpush1.msra.mxu0 0.0
        %1283 = vmatprep.subr.mxu0 0.0
        %1284 = vmatpush1.msra.mxu0 0.0
        %1285 = vmatprep.subr.mxu0 0.0
        %1286 = vmatpush1.msra.mxu0 0.0
        %1287 = vmatprep.subr.mxu0 0.0
        %1288 = vmatpush1.msra.mxu0 0.0
        %1289 = vmatprep.subr.mxu0 0.0
        %1290 = vmatpush1.msra.mxu0 0.0
        %1291 = vmatprep.subr.mxu0 0.0
        %1292 = vmatpush1.msra.mxu0 0.0
        %1293 = vmatprep.subr.mxu0 0.0
        %1294 = vmatpush1.msra.mxu0 0.0
        %1295 = vmatprep.subr.mxu0 0.0
        %1296 = vmatpush1.msra.mxu0 0.0
        %1297 = vmatprep.subr.mxu0 0.0
        %1298 = vmatpush1.msra.mxu0 0.0
        %1299 = vmatprep.subr.mxu0 0.0
        %1300 = vmatpush1.msra.mxu0 0.0
        %1301 = vmatprep.subr.mxu0 0.0
        %1302 = vmatpush1.msra.mxu0 0.0
        %1303 = vmatprep.mubr.f32.mxu0 0.0
        %1304 = vmatmul.mubr.f32.gmra.mrb[0].mxu0 %v1237
        %v1305 = vpop.f32.mrb[0].mxu0
        %v1306 = vadd.f32 0.0, %v1305
        %v1307 = vpop.f32.mrb[0].mxu0
        %1308 = vdwg.mxu0
        %v1309 = vrcp.pop %v1231
        %v1310 = vmul.f32 %v1306, %v1309
        %1312 = vrot.lane.b32.xlu0 %v1310, 16
        %v1313 = vpop.permute.xlu0 %1312
        %vm1315 = vcmask 195712
        %1316 = vst.msk [vmem:[#allocation5] sm:$0xff] %vm1315, %v1313
        %v1317 = vld [vmem:[#allocation2] sm:$0xff]
        %v1318 = vld [vmem:[#allocation3] sm:$0xff]
        %v1319 = vld [vmem:[#allocation4] sm:$0xff]
        %1321 = vrot.lane.b32.xlu0 %v1317, 104
        %v1322 = vpop.permute.xlu0 %1321
        %1324 = vrot.lane.b32.xlu0 %v1318, 104
        %v1325 = vpop.permute.xlu0 %1324
        %v1326 = vsel %vm801, %v1322, 0
        %v1328 = vsel %vm801, %v1325, 0
        %1330 = vmatprep.subr.mxu0 0.0
        %1331 = vmatpush1.xpose.msra.mxu0 %v1328
        %1332 = vmatprep.subr.mxu0 0.0
        %1333 = vmatpush1.xpose.msra.mxu0 0.0
        %1334 = vmatprep.subr.mxu0 0.0
        %1335 = vmatpush1.xpose.msra.mxu0 0.0
        %1336 = vmatprep.subr.mxu0 0.0
        %1337 = vmatpush1.xpose.msra.mxu0 0.0
        %1338 = vmatprep.subr.mxu0 0.0
        %1339 = vmatpush1.xpose.msra.mxu0 0.0
        %1340 = vmatprep.subr.mxu0 0.0
        %1341 = vmatpush1.xpose.msra.mxu0 0.0
        %1342 = vmatprep.subr.mxu0 0.0
        %1343 = vmatpush1.xpose.msra.mxu0 0.0
        %1344 = vmatprep.subr.mxu0 0.0
        %1345 = vmatpush1.xpose.msra.mxu0 0.0
        %1346 = vmatprep.subr.mxu0 0.0
        %1347 = vmatpush1.xpose.msra.mxu0 0.0
        %1348 = vmatprep.subr.mxu0 0.0
        %1349 = vmatpush1.xpose.msra.mxu0 0.0
        %1350 = vmatprep.subr.mxu0 0.0
        %1351 = vmatpush1.xpose.msra.mxu0 0.0
        %1352 = vmatprep.subr.mxu0 0.0
        %1353 = vmatpush1.xpose.msra.mxu0 0.0
        %1354 = vmatprep.subr.mxu0 0.0
        %1355 = vmatpush1.xpose.msra.mxu0 0.0
        %1356 = vmatprep.subr.mxu0 0.0
        %1357 = vmatpush1.xpose.msra.mxu0 0.0
        %1358 = vmatprep.subr.mxu0 0.0
        %1359 = vmatpush1.xpose.msra.mxu0 0.0
        %1360 = vmatprep.subr.mxu0 0.0
        %1361 = vmatpush1.xpose.msra.mxu0 0.0
        %1362 = vmatprep.subr.mxu0 0.0
        %1363 = vmatpush1.xpose.msra.mxu0 0.0
        %1364 = vmatprep.subr.mxu0 0.0
        %1365 = vmatpush1.xpose.msra.mxu0 0.0
        %1366 = vmatprep.subr.mxu0 0.0
        %1367 = vmatpush1.xpose.msra.mxu0 0.0
        %1368 = vmatprep.subr.mxu0 0.0
        %1369 = vmatpush1.xpose.msra.mxu0 0.0
        %1370 = vmatprep.subr.mxu0 0.0
        %1371 = vmatpush1.xpose.msra.mxu0 0.0
        %1372 = vmatprep.subr.mxu0 0.0
        %1373 = vmatpush1.xpose.msra.mxu0 0.0
        %1374 = vmatprep.subr.mxu0 0.0
        %1375 = vmatpush1.xpose.msra.mxu0 0.0
        %1376 = vmatprep.subr.mxu0 0.0
        %1377 = vmatpush1.xpose.msra.mxu0 0.0
        %1378 = vmatprep.subr.mxu0 0.0
        %1379 = vmatpush1.xpose.msra.mxu0 0.0
        %1380 = vmatprep.subr.mxu0 0.0
        %1381 = vmatpush1.xpose.msra.mxu0 0.0
        %1382 = vmatprep.subr.mxu0 0.0
        %1383 = vmatpush1.xpose.msra.mxu0 0.0
        %1384 = vmatprep.subr.mxu0 0.0
        %1385 = vmatpush1.xpose.msra.mxu0 0.0
        %1386 = vmatprep.subr.mxu0 0.0
        %1387 = vmatpush1.xpose.msra.mxu0 0.0
        %1388 = vmatprep.subr.mxu0 0.0
        %1389 = vmatpush1.xpose.msra.mxu0 0.0
        %1390 = vmatprep.subr.mxu0 0.0
        %1391 = vmatpush1.xpose.msra.mxu0 0.0
        %1392 = vmatprep.subr.mxu0 0.0
        %1393 = vmatpush1.xpose.msra.mxu0 0.0
        %1394 = vmatprep.mubr.f32.mxu0 0.0
        %1395 = vmatmul.mubr.f32.gmra.mrb[0].mxu0 %v1326
        %v1396 = vpop.f32.mrb[0].mxu0
        %v1397 = vadd.f32 0.0, %v1396
        %v1398 = vpop.f32.mrb[0].mxu0
        %1399 = vdwg.mxu0
        %v1400 = vsel %vm801, %v1397, -inf
        %1401 = vmax.xlane.f32.xlu0 %v1400
        %v1402 = vpop.xlane.xlu0 %1401
        %v1403 = vsub.f32 %v1397, %v1402
        %v1404 = vmul.f32 %v1403, 1.442695
        %v1405 = vpow.pop %v1404
        %v1406 = vsel %vm801, %v1405, 0.0
        %1407 = vadd.xlane.f32.xlu0 %v1406
        %v1408 = vpop.xlane.xlu0 %1407
        %1410 = vrot.lane.b32.xlu0 %v1319, 104
        %v1411 = vpop.permute.xlu0 %1410
        %v1414 = vsel %vm801, %v1405, 0
        %1416 = vmatprep.subr.mxu0 0.0
        %1417 = vmatpush1.msra.mxu0 %v1411
        %1418 = vmatprep.subr.mxu0 0.0
        %1419 = vmatpush1.msra.mxu0 0.0
        %1420 = vmatprep.subr.mxu0 0.0
        %1421 = vmatpush1.msra.mxu0 0.0
        %1422 = vmatprep.subr.mxu0 0.0
        %1423 = vmatpush1.msra.mxu0 0.0
        %1424 = vmatprep.subr.mxu0 0.0
        %1425 = vmatpush1.msra.mxu0 0.0
        %1426 = vmatprep.subr.mxu0 0.0
        %1427 = vmatpush1.msra.mxu0 0.0
        %1428 = vmatprep.subr.mxu0 0.0
        %1429 = vmatpush1.msra.mxu0 0.0
        %1430 = vmatprep.subr.mxu0 0.0
        %1431 = vmatpush1.msra.mxu0 0.0
        %1432 = vmatprep.subr.mxu0 0.0
        %1433 = vmatpush1.msra.mxu0 0.0
        %1434 = vmatprep.subr.mxu0 0.0
        %1435 = vmatpush1.msra.mxu0 0.0
        %1436 = vmatprep.subr.mxu0 0.0
        %1437 = vmatpush1.msra.mxu0 0.0
        %1438 = vmatprep.subr.mxu0 0.0
        %1439 = vmatpush1.msra.mxu0 0.0
        %1440 = vmatprep.subr.mxu0 0.0
        %1441 = vmatpush1.msra.mxu0 0.0
        %1442 = vmatprep.subr.mxu0 0.0
        %1443 = vmatpush1.msra.mxu0 0.0
        %1444 = vmatprep.subr.mxu0 0.0
        %1445 = vmatpush1.msra.mxu0 0.0
        %1446 = vmatprep.subr.mxu0 0.0
        %1447 = vmatpush1.msra.mxu0 0.0
        %1448 = vmatprep.subr.mxu0 0.0
        %1449 = vmatpush1.msra.mxu0 0.0
        %1450 = vmatprep.subr.mxu0 0.0
        %1451 = vmatpush1.msra.mxu0 0.0
        %1452 = vmatprep.subr.mxu0 0.0
        %1453 = vmatpush1.msra.mxu0 0.0
        %1454 = vmatprep.subr.mxu0 0.0
        %1455 = vmatpush1.msra.mxu0 0.0
        %1456 = vmatprep.subr.mxu0 0.0
        %1457 = vmatpush1.msra.mxu0 0.0
        %1458 = vmatprep.subr.mxu0 0.0
        %1459 = vmatpush1.msra.mxu0 0.0
        %1460 = vmatprep.subr.mxu0 0.0
        %1461 = vmatpush1.msra.mxu0 0.0
        %1462 = vmatprep.subr.mxu0 0.0
        %1463 = vmatpush1.msra.mxu0 0.0
        %1464 = vmatprep.subr.mxu0 0.0
        %1465 = vmatpush1.msra.mxu0 0.0
        %1466 = vmatprep.subr.mxu0 0.0
        %1467 = vmatpush1.msra.mxu0 0.0
        %1468 = vmatprep.subr.mxu0 0.0
        %1469 = vmatpush1.msra.mxu0 0.0
        %1470 = vmatprep.subr.mxu0 0.0
        %1471 = vmatpush1.msra.mxu0 0.0
        %1472 = vmatprep.subr.mxu0 0.0
        %1473 = vmatpush1.msra.mxu0 0.0
        %1474 = vmatprep.subr.mxu0 0.0
        %1475 = vmatpush1.msra.mxu0 0.0
        %1476 = vmatprep.subr.mxu0 0.0
        %1477 = vmatpush1.msra.mxu0 0.0
        %1478 = vmatprep.subr.mxu0 0.0
        %1479 = vmatpush1.msra.mxu0 0.0
        %1480 = vmatprep.mubr.f32.mxu0 0.0
        %1481 = vmatmul.mubr.f32.gmra.mrb[0].mxu0 %v1414
        %v1482 = vpop.f32.mrb[0].mxu0
        %v1483 = vadd.f32 0.0, %v1482
        %v1484 = vpop.f32.mrb[0].mxu0
        %1485 = vdwg.mxu0
        %v1486 = vrcp.pop %v1408
        %v1487 = vmul.f32 %v1483, %v1486
        %1489 = vrot.lane.b32.xlu0 %v1487, 24
        %v1490 = vpop.permute.xlu0 %1489
        %vm1492 = vcmask 261312
        %1493 = vst.msk [vmem:[#allocation5] sm:$0xff] %vm1492, %v1490
        %v1494 = vld [vmem:[#allocation5] sm:$0xff]
        %v1495 = vld [vmem:[#allocation20] sm:$0xff]
        %v1496 = vld [vmem:[#allocation20 + $0x8] sm:$0xff]
        %v1497 = vld [vmem:[#allocation20 + $0x10] sm:$0xff]
        %v1498 = vld [vmem:[#allocation20 + $0x18] sm:$0xff]
        %v1499 = vld [vmem:[#allocation21] sm:$0x1]
        %v1501 = vlaneseq
        %v1502 = vshrl.u32 %v1501, 7
        %v1503 = vsub.s32 0, %v1502
        %v1504 = vrot.slane %v1499, %v1503
        %v1507 = vsel %vm722, %v1494, 0
        %1509 = vmatprep.subr.mxu0 0.0
        %1510 = vmatpush1.msra.mxu0 %v1495
        %1511 = vmatprep.subr.mxu0 0.0
        %1512 = vmatpush1.msra.mxu0 %v1496
        %1513 = vmatprep.subr.mxu0 0.0
        %1514 = vmatpush1.msra.mxu0 %v1497
        %1515 = vmatprep.subr.mxu0 0.0
        %1516 = vmatpush1.msra.mxu0 %v1498
        %1517 = vmatprep.subr.mxu0 0.0
        %1518 = vmatpush1.msra.mxu0 0.0
        %1519 = vmatprep.subr.mxu0 0.0
        %1520 = vmatpush1.msra.mxu0 0.0
        %1521 = vmatprep.subr.mxu0 0.0
        %1522 = vmatpush1.msra.mxu0 0.0
        %1523 = vmatprep.subr.mxu0 0.0
        %1524 = vmatpush1.msra.mxu0 0.0
        %1525 = vmatprep.subr.mxu0 0.0
        %1526 = vmatpush1.msra.mxu0 0.0
        %1527 = vmatprep.subr.mxu0 0.0
        %1528 = vmatpush1.msra.mxu0 0.0
        %1529 = vmatprep.subr.mxu0 0.0
        %1530 = vmatpush1.msra.mxu0 0.0
        %1531 = vmatprep.subr.mxu0 0.0
        %1532 = vmatpush1.msra.mxu0 0.0
        %1533 = vmatprep.subr.mxu0 0.0
        %1534 = vmatpush1.msra.mxu0 0.0
        %1535 = vmatprep.subr.mxu0 0.0
        %1536 = vmatpush1.msra.mxu0 0.0
        %1537 = vmatprep.subr.mxu0 0.0
        %1538 = vmatpush1.msra.mxu0 0.0
        %1539 = vmatprep.subr.mxu0 0.0
        %1540 = vmatpush1.msra.mxu0 0.0
        %1541 = vmatprep.subr.mxu0 0.0
        %1542 = vmatpush1.msra.mxu0 0.0
        %1543 = vmatprep.subr.mxu0 0.0
        %1544 = vmatpush1.msra.mxu0 0.0
        %1545 = vmatprep.subr.mxu0 0.0
        %1546 = vmatpush1.msra.mxu0 0.0
        %1547 = vmatprep.subr.mxu0 0.0
        %1548 = vmatpush1.msra.mxu0 0.0
        %1549 = vmatprep.subr.mxu0 0.0
        %1550 = vmatpush1.msra.mxu0 0.0
        %1551 = vmatprep.subr.mxu0 0.0
        %1552 = vmatpush1.msra.mxu0 0.0
        %1553 = vmatprep.subr.mxu0 0.0
        %1554 = vmatpush1.msra.mxu0 0.0
        %1555 = vmatprep.subr.mxu0 0.0
        %1556 = vmatpush1.msra.mxu0 0.0
        %1557 = vmatprep.subr.mxu0 0.0
        %1558 = vmatpush1.msra.mxu0 0.0
        %1559 = vmatprep.subr.mxu0 0.0
        %1560 = vmatpush1.msra.mxu0 0.0
        %1561 = vmatprep.subr.mxu0 0.0
        %1562 = vmatpush1.msra.mxu0 0.0
        %1563 = vmatprep.subr.mxu0 0.0
        %1564 = vmatpush1.msra.mxu0 0.0
        %1565 = vmatprep.subr.mxu0 0.0
        %1566 = vmatpush1.msra.mxu0 0.0
        %1567 = vmatprep.subr.mxu0 0.0
        %1568 = vmatpush1.msra.mxu0 0.0
        %1569 = vmatprep.subr.mxu0 0.0
        %1570 = vmatpush1.msra.mxu0 0.0
        %1571 = vmatprep.subr.mxu0 0.0
        %1572 = vmatpush1.msra.mxu0 0.0
        %1573 = vmatprep.mubr.f32.mxu0 0.0
        %1574 = vmatmul.mubr.f32.gmra.mrb[0].mxu0 %v1507
        %v1575 = vpop.f32.mrb[0].mxu0
        %v1576 = vadd.f32 %v1504, %v1575
        %v1577 = vpop.f32.mrb[0].mxu0
        %1578 = vdwg.mxu0
        %1579 = vst.msk [vmem:[%s536] sm:$0xff] %vm722, %v1576
        %s1580 = sand.u32 %s278, 1
        %s1581 = scalar_lea.sflag [#allocation8], %s1580
        %s1582 = sand.u32 %s278, 1
        %s1583 = smul.addr %s1582, 8
        %s1584 = scalar_lea.vmem [#allocation23], %s1583
        // Predicated region
        $region105: #{tpu_custom_call.1} parent=59 // pred_check
          %p1585 = pneg %p288
        $region106: #{tpu_custom_call.1} parent=59 // pred_check_branch
          %1587 = sbr.rel (%p1585) target = $region108
        $region107: #{tpu_custom_call.1} parent=59 // pred_region
          %s1589 = ssub.s32 128, 128
          %1590 = vsyncadd %s1581, %s1589
          %s1591 = sadd.s32 %s39, %s38
          %s1592 = smul.addr %s1591, 128
          %s1593 = scalar_lea.hbm %s10, %s1592
          %s1595 = sshll.u32 %s1584, 4
          %s1596 = int_to_ptr.vmem [resolvable:$true] %s1595
          %1598 = dma.vmem_to_hbm [thread:$0]  %s1596, 128, %s1593, %s1581
        $region108: #{tpu_custom_call.1} parent=59 // pred_fallthru
          _
      $region60: #{tpu_custom_call.1} parent=5 // pred_fallthru
        _
      %p1599 = scmp.le.s32.totalorder 2, %s29
      // Predicated region
      $region109: #{tpu_custom_call.1} parent=5 // pred_check
        %p1600 = pneg %p1599
      $region110: #{tpu_custom_call.1} parent=5 // pred_check_branch
        %1602 = sbr.rel (%p1600) target = $region112
      $region111: #{tpu_custom_call.1} parent=5 // pred_region
        %s1603 = ssub.s32 %s29, 2
        // Predicated region
        $region113: #{tpu_custom_call.1} parent=111 // pred_check
          %p1604 = pneg %p294
        $region114: #{tpu_custom_call.1} parent=111 // pred_check_branch
          %1606 = sbr.rel (%p1604) target = $region116
        $region115: #{tpu_custom_call.1} parent=111 // pred_region
          %s1607 = sand.u32 %s279, 1
          %s1608 = scalar_lea.sflag [#allocation8], %s1607
          %s1609 = sand.u32 %s279, 1
          %s1610 = smul.addr %s1609, 8
          %s1611 = scalar_lea.vmem [#allocation23], %s1610
          %1612 = dma.done %s1608, 128
        $region116: #{tpu_custom_call.1} parent=111 // pred_fallthru
          _
      $region112: #{tpu_custom_call.1} parent=5 // pred_fallthru
        _
    $region6: #{tpu_custom_call.1} parent=1 // loop_footer
      %s33 = sadd.s32 1, %s29
    $region7: #{tpu_custom_call.1} parent=1 // loop_footer_branch
      %28 = sbr.rel target = $region3
    $region8: #{tpu_custom_call.1} parent=1 // loop_exit
      _
    %1613 = vsyncpa [#allocation7], 1
    %s1614 = scalar_lea.sflag [#allocation7], 1
    %1615 = vsyncpa %s1614, 1
    %1616 = vsyncpa [#allocation10], 1
    %s1617 = scalar_lea.sflag [#allocation10], 1
    %1618 = vsyncpa %s1617, 1
    %1619 = vsyncpa [#allocation13], 1
    %1620 = vsyncpa [#allocation16], 1
    %1621 = vsyncpa [#allocation19], 1
    %1622 = vsyncpa [#allocation22], 1
    %1623 = vsyncpa [#allocation8], 1
    %s1624 = scalar_lea.sflag [#allocation8], 1
    %1625 = vsyncpa %s1624, 1

</llo_original>
